<compile_context>
chip_gen: v7x
topology: tpu7x:2x2x1
jax: 0.10.0
libtpu: 0.0.40
codegen_flags: <defaults>
</compile_context>

<pallas_src>
import jax
import jax.numpy as jnp
from jax.experimental import pallas as pl
from jax.experimental.pallas import tpu as pltpu


def lstm_net_kernel(x_ref,                 # (T*B, D)  flattened time-major input
                    wih0_ref,              # (D, 4H)   layer-0 input weights (gate-reordered)
                    whh0_ref,              # (H, 4H)   layer-0 recurrent weights
                    b0_ref,                # (1, 4H)   layer-0 summed bias
                    w1_ref,                # (2H, 4H)  layer-1 fused [W_ih1; W_hh1]
                    b1_ref,                # (1, 4H)   layer-1 summed bias
                    fcw_ref,               # (H, C)
                    fcb_ref,               # (1, C)
                    out_ref):              # (B, C)
    B = out_ref.shape[0]
    TB, _ = x_ref.shape
    T = TB // B
    H = whh0_ref.shape[0]

    whh0 = whh0_ref[...]
    w1 = w1_ref[...]
    # bias broadcast hoisted out of the recurrence (JAX does not CSE broadcasts)
    b1 = jnp.broadcast_to(b1_ref[...], (B, 4 * H))

    # --- hoisted layer-0 input projection for all timesteps: one MXU pass ---
    xproj = (jnp.dot(x_ref[...], wih0_ref[...], preferred_element_type=jnp.float32)
             + b0_ref[...])                # (T*B, 4H), b0 folded in

    def activations(gates):
        # gate columns are pre-ordered [i, f, o | g]:
        # single sigmoid pass over 3H lanes + single tanh pass over H lanes.
        sig = jax.nn.sigmoid(gates[:, :3 * H])
        g = jnp.tanh(gates[:, 3 * H:])
        return sig[:, :H], sig[:, H:2 * H], sig[:, 2 * H:3 * H], g

    h0 = jnp.zeros((B, H), jnp.float32)    # h0/c0 initialised to zeros (as in forward)
    c0 = jnp.zeros((B, H), jnp.float32)
    h1 = jnp.zeros((B, H), jnp.float32)
    c1 = jnp.zeros((B, H), jnp.float32)

    # statically unrolled time loop (T is small and static)
    for t in range(T):
        # layer 0: only the recurrent matmul remains on the critical path
        g0 = xproj[t * B:(t + 1) * B, :] + jnp.dot(
            h0, whh0, preferred_element_type=jnp.float32)
        i0, f0, o0, gg0 = activations(g0)
        c0 = f0 * c0 + i0 * gg0
        h0 = o0 * jnp.tanh(c0)

        # TODO(synk): inter-layer dropout (p=0.2) applies only in training;
        #             eval-mode forward is identity, which is what we reproduce.

        # layer 1: fused input+hidden matmul  [h0, h1] @ [W_ih1; W_hh1]
        hcat = jnp.concatenate([h0, h1], axis=1)            # (B, 2H)
        g1 = jnp.dot(hcat, w1, preferred_element_type=jnp.float32) + b1
        i1, f1, o1, gg1 = activations(g1)
        c1 = f1 * c1 + i1 * gg1
        h1 = o1 * jnp.tanh(c1)

    # out = last timestep -> dropout(eval=identity) -> fc
    out_ref[...] = (jnp.dot(h1, fcw_ref[...], preferred_element_type=jnp.float32)
                    + fcb_ref[...])


def _gate_reorder(a, H):
    """Reorder PyTorch gate blocks along axis 0: [i, f, g, o] -> [i, f, o, g]."""
    return jnp.concatenate([a[:2 * H], a[3 * H:4 * H], a[2 * H:3 * H]], axis=0)


def _lstm_net_forward_impl(x, params):
    """x: (B, T, D) batch-first, like the PyTorch module. Returns (B, num_classes)."""
    B, T, D = x.shape
    H = params["weight_hh_l0"].shape[1]
    C = params["fc_weight"].shape[0]
    Bp = max(8, ((B + 7) // 8) * 8)          # pad batch to a sublane multiple

    f32 = jnp.float32
    # weights: gate-reorder + transpose so the kernel does plain (B,K)@(K,4H) matmuls
    wih0 = _gate_reorder(params["weight_ih_l0"].astype(f32), H).T          # (D, 4H)
    whh0 = _gate_reorder(params["weight_hh_l0"].astype(f32), H).T          # (H, 4H)
    b0 = _gate_reorder((params["bias_ih_l0"] + params["bias_hh_l0"]).astype(f32),
                       H).reshape(1, 4 * H)
    w1 = jnp.concatenate(
        [_gate_reorder(params["weight_ih_l1"].astype(f32), H).T,           # (H, 4H)
         _gate_reorder(params["weight_hh_l1"].astype(f32), H).T],          # (H, 4H)
        axis=0)                                                            # (2H, 4H)
    b1 = _gate_reorder((params["bias_ih_l1"] + params["bias_hh_l1"]).astype(f32),
                       H).reshape(1, 4 * H)
    fcw = params["fc_weight"].T.astype(f32)                                # (H, C)
    fcb = params["fc_bias"].reshape(1, C).astype(f32)

    # time-major, batch-padded, flattened to (T*Bp, D) for the hoisted projection
    x_tb = jnp.transpose(x, (1, 0, 2)).astype(f32)                         # (T, B, D)
    x_tb = jnp.pad(x_tb, ((0, 0), (0, Bp - B), (0, 0)))
    x_flat = x_tb.reshape(T * Bp, D)

    # Everything fits in VMEM with huge margin (<0.2 MiB) on v5e/v6e/v7x, so no
    # grid/streaming is needed; if T/B/H grow, stream x over T with a BlockSpec
    # grid instead of whole-array residency.
    vmem = pl.BlockSpec(memory_space=pltpu.MemorySpace.VMEM)
    out = pl.pallas_call(
        lstm_net_kernel,
        out_shape=jax.ShapeDtypeStruct((Bp, C), jnp.float32),
        in_specs=[vmem] * 8,
        out_specs=vmem,
    )(x_flat, wih0, whh0, b0, w1, b1, fcw, fcb)
    return out[:B]


lstm_net_forward = jax.jit(_lstm_net_forward_impl)


def _reference_forward(x, params):
    """Pure-JAX reference of the PyTorch forward (eval mode)."""
    B, T, D = x.shape
    H = params["weight_hh_l0"].shape[1]

    def run_layer(seq, wih, whh, bih, bhh):
        h = jnp.zeros((B, H), jnp.float32)
        c = jnp.zeros((B, H), jnp.float32)
        outs = []
        for t in range(T):
            gates = seq[:, t, :] @ wih.T + h @ whh.T + bih + bhh
            i = jax.nn.sigmoid(gates[:, 0 * H:1 * H])
            f = jax.nn.sigmoid(gates[:, 1 * H:2 * H])
            g = jnp.tanh(gates[:, 2 * H:3 * H])
            o = jax.nn.sigmoid(gates[:, 3 * H:4 * H])
            c = f * c + i * g
            h = o * jnp.tanh(c)
            outs.append(h)
        return jnp.stack(outs, axis=1)

    h0_seq = run_layer(x, params["weight_ih_l0"], params["weight_hh_l0"],
                       params["bias_ih_l0"], params["bias_hh_l0"])
    h1_seq = run_layer(h0_seq, params["weight_ih_l1"], params["weight_hh_l1"],
                       params["bias_ih_l1"], params["bias_hh_l1"])
    last = h1_seq[:, -1, :]
    return last @ params["fc_weight"].T + params["fc_bias"]


if __name__ == "__main__":
    # module hyper-params (small): input_size=16, hidden=32, num_layers=2, classes=4
    B, T, D, H, C = 2, 8, 16, 32, 4

    key = jax.random.PRNGKey(0)
    ks = jax.random.split(key, 12)
    s = 1.0 / jnp.sqrt(H)   # PyTorch LSTM/Linear default init range

    params = {
        "weight_ih_l0": jax.random.uniform(ks[0], (4 * H, D), jnp.float32, -s, s),
        "weight_hh_l0": jax.random.uniform(ks[1], (4 * H, H), jnp.float32, -s, s),
        "bias_ih_l0":   jax.random.uniform(ks[2], (4 * H,), jnp.float32, -s, s),
        "bias_hh_l0":   jax.random.uniform(ks[3], (4 * H,), jnp.float32, -s, s),
        "weight_ih_l1": jax.random.uniform(ks[4], (4 * H, H), jnp.float32, -s, s),
        "weight_hh_l1": jax.random.uniform(ks[5], (4 * H, H), jnp.float32, -s, s),
        "bias_ih_l1":   jax.random.uniform(ks[6], (4 * H,), jnp.float32, -s, s),
        "bias_hh_l1":   jax.random.uniform(ks[7], (4 * H,), jnp.float32, -s, s),
        "fc_weight":    jax.random.uniform(ks[8], (C, H), jnp.float32, -s, s),
        "fc_bias":      jax.random.uniform(ks[9], (C,), jnp.float32, -s, s),
    }

    x = jax.random.normal(ks[10], (B, T, D), jnp.float32)   # batch_first input

    out = lstm_net_forward(x, params)
    out = jax.block_until_ready(out)

    ref = _reference_forward(x, params)
    assert out.shape == (B, C)
    assert jnp.allclose(out, ref, atol=1e-4, rtol=1e-4), "kernel mismatch vs reference"

    print("KERNEL_OK")
</pallas_src>

<mosaic_0001>
module attributes {stable_mosaic.version = 11 : i64} {
  func.func @lstm_net_kernel(%arg0: memref<64x16xf32, #tpu.memory_space<vmem>>, %arg1: memref<16x128xf32, #tpu.memory_space<vmem>>, %arg2: memref<32x128xf32, #tpu.memory_space<vmem>>, %arg3: memref<1x128xf32, #tpu.memory_space<vmem>>, %arg4: memref<64x128xf32, #tpu.memory_space<vmem>>, %arg5: memref<1x128xf32, #tpu.memory_space<vmem>>, %arg6: memref<32x4xf32, #tpu.memory_space<vmem>>, %arg7: memref<1x4xf32, #tpu.memory_space<vmem>>, %arg8: memref<8x4xf32, #tpu.memory_space<vmem>>) attributes {dimension_semantics = [], scalar_prefetch = 0 : i64, scratch_operands = 0 : i64, tpu.core_type = #tpu.core_type<tc>} {
    %c0 = arith.constant 0 : index
    %c0_0 = arith.constant 0 : index
    %0 = vector.load %arg2[%c0, %c0_0] : memref<32x128xf32, #tpu.memory_space<vmem>>, vector<32x128xf32>
    %c0_1 = arith.constant 0 : index
    %c0_2 = arith.constant 0 : index
    %1 = vector.load %arg4[%c0_1, %c0_2] : memref<64x128xf32, #tpu.memory_space<vmem>>, vector<64x128xf32>
    %c0_3 = arith.constant 0 : index
    %c0_4 = arith.constant 0 : index
    %2 = vector.load %arg5[%c0_3, %c0_4] : memref<1x128xf32, #tpu.memory_space<vmem>>, vector<1x128xf32>
    %3 = vector.shape_cast %2 : vector<1x128xf32> to vector<1x128xf32>
    %4 = vector.broadcast %3 : vector<1x128xf32> to vector<8x128xf32>
    %c0_5 = arith.constant 0 : index
    %c0_6 = arith.constant 0 : index
    %5 = vector.load %arg0[%c0_5, %c0_6] : memref<64x16xf32, #tpu.memory_space<vmem>>, vector<64x16xf32>
    %c0_7 = arith.constant 0 : index
    %c0_8 = arith.constant 0 : index
    %6 = vector.load %arg1[%c0_7, %c0_8] : memref<16x128xf32, #tpu.memory_space<vmem>>, vector<16x128xf32>
    %cst = arith.constant dense<0.000000e+00> : vector<64x128xf32>
    %7 = tpu.matmul %5, %6, %cst {dimension_numbers = #tpu.dot_dimension_numbers<[1], [0], [0], [1], [0, 0, 1, 1], [], []>} : vector<64x16xf32>, vector<16x128xf32>, vector<64x128xf32> -> vector<64x128xf32>
    %c0_9 = arith.constant 0 : index
    %c0_10 = arith.constant 0 : index
    %8 = vector.load %arg3[%c0_9, %c0_10] : memref<1x128xf32, #tpu.memory_space<vmem>>, vector<1x128xf32>
    %9 = vector.broadcast %8 : vector<1x128xf32> to vector<64x128xf32>
    %10 = arith.addf %7, %9 : vector<64x128xf32>
    %cst_11 = arith.constant 0.000000e+00 : f32
    %11 = vector.broadcast %cst_11 : f32 to vector<8x32xf32>
    %cst_12 = arith.constant 0.000000e+00 : f32
    %12 = vector.broadcast %cst_12 : f32 to vector<8x32xf32>
    %cst_13 = arith.constant 0.000000e+00 : f32
    %13 = vector.broadcast %cst_13 : f32 to vector<8x32xf32>
    %cst_14 = arith.constant 0.000000e+00 : f32
    %14 = vector.broadcast %cst_14 : f32 to vector<8x32xf32>
    %15 = vector.extract_strided_slice %10 {offsets = [0, 0], sizes = [8, 128], strides = [1, 1]} : vector<64x128xf32> to vector<8x128xf32>
    %cst_15 = arith.constant dense<0.000000e+00> : vector<8x128xf32>
    %16 = tpu.matmul %11, %0, %cst_15 {dimension_numbers = #tpu.dot_dimension_numbers<[1], [0], [0], [1], [0, 0, 1, 1], [], []>} : vector<8x32xf32>, vector<32x128xf32>, vector<8x128xf32> -> vector<8x128xf32>
    %17 = arith.addf %15, %16 : vector<8x128xf32>
    %18 = vector.extract_strided_slice %17 {offsets = [0, 0], sizes = [8, 96], strides = [1, 1]} : vector<8x128xf32> to vector<8x96xf32>
    %19 = arith.negf %18 : vector<8x96xf32>
    %20 = math.exp %19 : vector<8x96xf32>
    %cst_16 = arith.constant 1.000000e+00 : f32
    %21 = vector.broadcast %cst_16 : f32 to vector<8x96xf32>
    %22 = arith.addf %21, %20 : vector<8x96xf32>
    %23 = arith.divf %21, %22 : vector<8x96xf32>
    %24 = vector.extract_strided_slice %17 {offsets = [0, 96], sizes = [8, 32], strides = [1, 1]} : vector<8x128xf32> to vector<8x32xf32>
    %25 = math.tanh %24 : vector<8x32xf32>
    %26 = vector.extract_strided_slice %23 {offsets = [0, 0], sizes = [8, 32], strides = [1, 1]} : vector<8x96xf32> to vector<8x32xf32>
    %27 = vector.extract_strided_slice %23 {offsets = [0, 32], sizes = [8, 32], strides = [1, 1]} : vector<8x96xf32> to vector<8x32xf32>
    %28 = vector.extract_strided_slice %23 {offsets = [0, 64], sizes = [8, 32], strides = [1, 1]} : vector<8x96xf32> to vector<8x32xf32>
    %29 = arith.mulf %27, %12 : vector<8x32xf32>
    %30 = arith.mulf %26, %25 : vector<8x32xf32>
    %31 = arith.addf %29, %30 : vector<8x32xf32>
    %32 = math.tanh %31 : vector<8x32xf32>
    %33 = arith.mulf %28, %32 : vector<8x32xf32>
    %34 = tpu.concatenate %33, %13 in 1 : vector<8x32xf32>, vector<8x32xf32> -> vector<8x64xf32>
    %cst_17 = arith.constant dense<0.000000e+00> : vector<8x128xf32>
    %35 = tpu.matmul %34, %1, %cst_17 {dimension_numbers = #tpu.dot_dimension_numbers<[1], [0], [0], [1], [0, 0, 1, 1], [], []>} : vector<8x64xf32>, vector<64x128xf32>, vector<8x128xf32> -> vector<8x128xf32>
    %36 = arith.addf %35, %4 : vector<8x128xf32>
    %37 = vector.extract_strided_slice %36 {offsets = [0, 0], sizes = [8, 96], strides = [1, 1]} : vector<8x128xf32> to vector<8x96xf32>
    %38 = arith.negf %37 : vector<8x96xf32>
    %39 = math.exp %38 : vector<8x96xf32>
    %cst_18 = arith.constant 1.000000e+00 : f32
    %40 = vector.broadcast %cst_18 : f32 to vector<8x96xf32>
    %41 = arith.addf %40, %39 : vector<8x96xf32>
    %42 = arith.divf %40, %41 : vector<8x96xf32>
    %43 = vector.extract_strided_slice %36 {offsets = [0, 96], sizes = [8, 32], strides = [1, 1]} : vector<8x128xf32> to vector<8x32xf32>
    %44 = math.tanh %43 : vector<8x32xf32>
    %45 = vector.extract_strided_slice %42 {offsets = [0, 0], sizes = [8, 32], strides = [1, 1]} : vector<8x96xf32> to vector<8x32xf32>
    %46 = vector.extract_strided_slice %42 {offsets = [0, 32], sizes = [8, 32], strides = [1, 1]} : vector<8x96xf32> to vector<8x32xf32>
    %47 = vector.extract_strided_slice %42 {offsets = [0, 64], sizes = [8, 32], strides = [1, 1]} : vector<8x96xf32> to vector<8x32xf32>
    %48 = arith.mulf %46, %14 : vector<8x32xf32>
    %49 = arith.mulf %45, %44 : vector<8x32xf32>
    %50 = arith.addf %48, %49 : vector<8x32xf32>
    %51 = math.tanh %50 : vector<8x32xf32>
    %52 = arith.mulf %47, %51 : vector<8x32xf32>
    %53 = vector.extract_strided_slice %10 {offsets = [8, 0], sizes = [8, 128], strides = [1, 1]} : vector<64x128xf32> to vector<8x128xf32>
    %cst_19 = arith.constant dense<0.000000e+00> : vector<8x128xf32>
    %54 = tpu.matmul %33, %0, %cst_19 {dimension_numbers = #tpu.dot_dimension_numbers<[1], [0], [0], [1], [0, 0, 1, 1], [], []>} : vector<8x32xf32>, vector<32x128xf32>, vector<8x128xf32> -> vector<8x128xf32>
    %55 = arith.addf %53, %54 : vector<8x128xf32>
    %56 = vector.extract_strided_slice %55 {offsets = [0, 0], sizes = [8, 96], strides = [1, 1]} : vector<8x128xf32> to vector<8x96xf32>
    %57 = arith.negf %56 : vector<8x96xf32>
    %58 = math.exp %57 : vector<8x96xf32>
    %cst_20 = arith.constant 1.000000e+00 : f32
    %59 = vector.broadcast %cst_20 : f32 to vector<8x96xf32>
    %60 = arith.addf %59, %58 : vector<8x96xf32>
    %61 = arith.divf %59, %60 : vector<8x96xf32>
    %62 = vector.extract_strided_slice %55 {offsets = [0, 96], sizes = [8, 32], strides = [1, 1]} : vector<8x128xf32> to vector<8x32xf32>
    %63 = math.tanh %62 : vector<8x32xf32>
    %64 = vector.extract_strided_slice %61 {offsets = [0, 0], sizes = [8, 32], strides = [1, 1]} : vector<8x96xf32> to vector<8x32xf32>
    %65 = vector.extract_strided_slice %61 {offsets = [0, 32], sizes = [8, 32], strides = [1, 1]} : vector<8x96xf32> to vector<8x32xf32>
    %66 = vector.extract_strided_slice %61 {offsets = [0, 64], sizes = [8, 32], strides = [1, 1]} : vector<8x96xf32> to vector<8x32xf32>
    %67 = arith.mulf %65, %31 : vector<8x32xf32>
    %68 = arith.mulf %64, %63 : vector<8x32xf32>
    %69 = arith.addf %67, %68 : vector<8x32xf32>
    %70 = math.tanh %69 : vector<8x32xf32>
    %71 = arith.mulf %66, %70 : vector<8x32xf32>
    %72 = tpu.concatenate %71, %52 in 1 : vector<8x32xf32>, vector<8x32xf32> -> vector<8x64xf32>
    %cst_21 = arith.constant dense<0.000000e+00> : vector<8x128xf32>
    %73 = tpu.matmul %72, %1, %cst_21 {dimension_numbers = #tpu.dot_dimension_numbers<[1], [0], [0], [1], [0, 0, 1, 1], [], []>} : vector<8x64xf32>, vector<64x128xf32>, vector<8x128xf32> -> vector<8x128xf32>
    %74 = arith.addf %73, %4 : vector<8x128xf32>
    %75 = vector.extract_strided_slice %74 {offsets = [0, 0], sizes = [8, 96], strides = [1, 1]} : vector<8x128xf32> to vector<8x96xf32>
    %76 = arith.negf %75 : vector<8x96xf32>
    %77 = math.exp %76 : vector<8x96xf32>
    %cst_22 = arith.constant 1.000000e+00 : f32
    %78 = vector.broadcast %cst_22 : f32 to vector<8x96xf32>
    %79 = arith.addf %78, %77 : vector<8x96xf32>
    %80 = arith.divf %78, %79 : vector<8x96xf32>
    %81 = vector.extract_strided_slice %74 {offsets = [0, 96], sizes = [8, 32], strides = [1, 1]} : vector<8x128xf32> to vector<8x32xf32>
    %82 = math.tanh %81 : vector<8x32xf32>
    %83 = vector.extract_strided_slice %80 {offsets = [0, 0], sizes = [8, 32], strides = [1, 1]} : vector<8x96xf32> to vector<8x32xf32>
    %84 = vector.extract_strided_slice %80 {offsets = [0, 32], sizes = [8, 32], strides = [1, 1]} : vector<8x96xf32> to vector<8x32xf32>
    %85 = vector.extract_strided_slice %80 {offsets = [0, 64], sizes = [8, 32], strides = [1, 1]} : vector<8x96xf32> to vector<8x32xf32>
    %86 = arith.mulf %84, %50 : vector<8x32xf32>
    %87 = arith.mulf %83, %82 : vector<8x32xf32>
    %88 = arith.addf %86, %87 : vector<8x32xf32>
    %89 = math.tanh %88 : vector<8x32xf32>
    %90 = arith.mulf %85, %89 : vector<8x32xf32>
    %91 = vector.extract_strided_slice %10 {offsets = [16, 0], sizes = [8, 128], strides = [1, 1]} : vector<64x128xf32> to vector<8x128xf32>
    %cst_23 = arith.constant dense<0.000000e+00> : vector<8x128xf32>
    %92 = tpu.matmul %71, %0, %cst_23 {dimension_numbers = #tpu.dot_dimension_numbers<[1], [0], [0], [1], [0, 0, 1, 1], [], []>} : vector<8x32xf32>, vector<32x128xf32>, vector<8x128xf32> -> vector<8x128xf32>
    %93 = arith.addf %91, %92 : vector<8x128xf32>
    %94 = vector.extract_strided_slice %93 {offsets = [0, 0], sizes = [8, 96], strides = [1, 1]} : vector<8x128xf32> to vector<8x96xf32>
    %95 = arith.negf %94 : vector<8x96xf32>
    %96 = math.exp %95 : vector<8x96xf32>
    %cst_24 = arith.constant 1.000000e+00 : f32
    %97 = vector.broadcast %cst_24 : f32 to vector<8x96xf32>
    %98 = arith.addf %97, %96 : vector<8x96xf32>
    %99 = arith.divf %97, %98 : vector<8x96xf32>
    %100 = vector.extract_strided_slice %93 {offsets = [0, 96], sizes = [8, 32], strides = [1, 1]} : vector<8x128xf32> to vector<8x32xf32>
    %101 = math.tanh %100 : vector<8x32xf32>
    %102 = vector.extract_strided_slice %99 {offsets = [0, 0], sizes = [8, 32], strides = [1, 1]} : vector<8x96xf32> to vector<8x32xf32>
    %103 = vector.extract_strided_slice %99 {offsets = [0, 32], sizes = [8, 32], strides = [1, 1]} : vector<8x96xf32> to vector<8x32xf32>
    %104 = vector.extract_strided_slice %99 {offsets = [0, 64], sizes = [8, 32], strides = [1, 1]} : vector<8x96xf32> to vector<8x32xf32>
    %105 = arith.mulf %103, %69 : vector<8x32xf32>
    %106 = arith.mulf %102, %101 : vector<8x32xf32>
    %107 = arith.addf %105, %106 : vector<8x32xf32>
    %108 = math.tanh %107 : vector<8x32xf32>
    %109 = arith.mulf %104, %108 : vector<8x32xf32>
    %110 = tpu.concatenate %109, %90 in 1 : vector<8x32xf32>, vector<8x32xf32> -> vector<8x64xf32>
    %cst_25 = arith.constant dense<0.000000e+00> : vector<8x128xf32>
    %111 = tpu.matmul %110, %1, %cst_25 {dimension_numbers = #tpu.dot_dimension_numbers<[1], [0], [0], [1], [0, 0, 1, 1], [], []>} : vector<8x64xf32>, vector<64x128xf32>, vector<8x128xf32> -> vector<8x128xf32>
    %112 = arith.addf %111, %4 : vector<8x128xf32>
    %113 = vector.extract_strided_slice %112 {offsets = [0, 0], sizes = [8, 96], strides = [1, 1]} : vector<8x128xf32> to vector<8x96xf32>
    %114 = arith.negf %113 : vector<8x96xf32>
    %115 = math.exp %114 : vector<8x96xf32>
    %cst_26 = arith.constant 1.000000e+00 : f32
    %116 = vector.broadcast %cst_26 : f32 to vector<8x96xf32>
    %117 = arith.addf %116, %115 : vector<8x96xf32>
    %118 = arith.divf %116, %117 : vector<8x96xf32>
    %119 = vector.extract_strided_slice %112 {offsets = [0, 96], sizes = [8, 32], strides = [1, 1]} : vector<8x128xf32> to vector<8x32xf32>
    %120 = math.tanh %119 : vector<8x32xf32>
    %121 = vector.extract_strided_slice %118 {offsets = [0, 0], sizes = [8, 32], strides = [1, 1]} : vector<8x96xf32> to vector<8x32xf32>
    %122 = vector.extract_strided_slice %118 {offsets = [0, 32], sizes = [8, 32], strides = [1, 1]} : vector<8x96xf32> to vector<8x32xf32>
    %123 = vector.extract_strided_slice %118 {offsets = [0, 64], sizes = [8, 32], strides = [1, 1]} : vector<8x96xf32> to vector<8x32xf32>
    %124 = arith.mulf %122, %88 : vector<8x32xf32>
    %125 = arith.mulf %121, %120 : vector<8x32xf32>
    %126 = arith.addf %124, %125 : vector<8x32xf32>
    %127 = math.tanh %126 : vector<8x32xf32>
    %128 = arith.mulf %123, %127 : vector<8x32xf32>
    %129 = vector.extract_strided_slice %10 {offsets = [24, 0], sizes = [8, 128], strides = [1, 1]} : vector<64x128xf32> to vector<8x128xf32>
    %cst_27 = arith.constant dense<0.000000e+00> : vector<8x128xf32>
    %130 = tpu.matmul %109, %0, %cst_27 {dimension_numbers = #tpu.dot_dimension_numbers<[1], [0], [0], [1], [0, 0, 1, 1], [], []>} : vector<8x32xf32>, vector<32x128xf32>, vector<8x128xf32> -> vector<8x128xf32>
    %131 = arith.addf %129, %130 : vector<8x128xf32>
    %132 = vector.extract_strided_slice %131 {offsets = [0, 0], sizes = [8, 96], strides = [1, 1]} : vector<8x128xf32> to vector<8x96xf32>
    %133 = arith.negf %132 : vector<8x96xf32>
    %134 = math.exp %133 : vector<8x96xf32>
    %cst_28 = arith.constant 1.000000e+00 : f32
    %135 = vector.broadcast %cst_28 : f32 to vector<8x96xf32>
    %136 = arith.addf %135, %134 : vector<8x96xf32>
    %137 = arith.divf %135, %136 : vector<8x96xf32>
    %138 = vector.extract_strided_slice %131 {offsets = [0, 96], sizes = [8, 32], strides = [1, 1]} : vector<8x128xf32> to vector<8x32xf32>
    %139 = math.tanh %138 : vector<8x32xf32>
    %140 = vector.extract_strided_slice %137 {offsets = [0, 0], sizes = [8, 32], strides = [1, 1]} : vector<8x96xf32> to vector<8x32xf32>
    %141 = vector.extract_strided_slice %137 {offsets = [0, 32], sizes = [8, 32], strides = [1, 1]} : vector<8x96xf32> to vector<8x32xf32>
    %142 = vector.extract_strided_slice %137 {offsets = [0, 64], sizes = [8, 32], strides = [1, 1]} : vector<8x96xf32> to vector<8x32xf32>
    %143 = arith.mulf %141, %107 : vector<8x32xf32>
    %144 = arith.mulf %140, %139 : vector<8x32xf32>
    %145 = arith.addf %143, %144 : vector<8x32xf32>
    %146 = math.tanh %145 : vector<8x32xf32>
    %147 = arith.mulf %142, %146 : vector<8x32xf32>
    %148 = tpu.concatenate %147, %128 in 1 : vector<8x32xf32>, vector<8x32xf32> -> vector<8x64xf32>
    %cst_29 = arith.constant dense<0.000000e+00> : vector<8x128xf32>
    %149 = tpu.matmul %148, %1, %cst_29 {dimension_numbers = #tpu.dot_dimension_numbers<[1], [0], [0], [1], [0, 0, 1, 1], [], []>} : vector<8x64xf32>, vector<64x128xf32>, vector<8x128xf32> -> vector<8x128xf32>
    %150 = arith.addf %149, %4 : vector<8x128xf32>
    %151 = vector.extract_strided_slice %150 {offsets = [0, 0], sizes = [8, 96], strides = [1, 1]} : vector<8x128xf32> to vector<8x96xf32>
    %152 = arith.negf %151 : vector<8x96xf32>
    %153 = math.exp %152 : vector<8x96xf32>
    %cst_30 = arith.constant 1.000000e+00 : f32
    %154 = vector.broadcast %cst_30 : f32 to vector<8x96xf32>
    %155 = arith.addf %154, %153 : vector<8x96xf32>
    %156 = arith.divf %154, %155 : vector<8x96xf32>
    %157 = vector.extract_strided_slice %150 {offsets = [0, 96], sizes = [8, 32], strides = [1, 1]} : vector<8x128xf32> to vector<8x32xf32>
    %158 = math.tanh %157 : vector<8x32xf32>
    %159 = vector.extract_strided_slice %156 {offsets = [0, 0], sizes = [8, 32], strides = [1, 1]} : vector<8x96xf32> to vector<8x32xf32>
    %160 = vector.extract_strided_slice %156 {offsets = [0, 32], sizes = [8, 32], strides = [1, 1]} : vector<8x96xf32> to vector<8x32xf32>
    %161 = vector.extract_strided_slice %156 {offsets = [0, 64], sizes = [8, 32], strides = [1, 1]} : vector<8x96xf32> to vector<8x32xf32>
    %162 = arith.mulf %160, %126 : vector<8x32xf32>
    %163 = arith.mulf %159, %158 : vector<8x32xf32>
    %164 = arith.addf %162, %163 : vector<8x32xf32>
    %165 = math.tanh %164 : vector<8x32xf32>
    %166 = arith.mulf %161, %165 : vector<8x32xf32>
    %167 = vector.extract_strided_slice %10 {offsets = [32, 0], sizes = [8, 128], strides = [1, 1]} : vector<64x128xf32> to vector<8x128xf32>
    %cst_31 = arith.constant dense<0.000000e+00> : vector<8x128xf32>
    %168 = tpu.matmul %147, %0, %cst_31 {dimension_numbers = #tpu.dot_dimension_numbers<[1], [0], [0], [1], [0, 0, 1, 1], [], []>} : vector<8x32xf32>, vector<32x128xf32>, vector<8x128xf32> -> vector<8x128xf32>
    %169 = arith.addf %167, %168 : vector<8x128xf32>
    %170 = vector.extract_strided_slice %169 {offsets = [0, 0], sizes = [8, 96], strides = [1, 1]} : vector<8x128xf32> to vector<8x96xf32>
    %171 = arith.negf %170 : vector<8x96xf32>
    %172 = math.exp %171 : vector<8x96xf32>
    %cst_32 = arith.constant 1.000000e+00 : f32
    %173 = vector.broadcast %cst_32 : f32 to vector<8x96xf32>
    %174 = arith.addf %173, %172 : vector<8x96xf32>
    %175 = arith.divf %173, %174 : vector<8x96xf32>
    %176 = vector.extract_strided_slice %169 {offsets = [0, 96], sizes = [8, 32], strides = [1, 1]} : vector<8x128xf32> to vector<8x32xf32>
    %177 = math.tanh %176 : vector<8x32xf32>
    %178 = vector.extract_strided_slice %175 {offsets = [0, 0], sizes = [8, 32], strides = [1, 1]} : vector<8x96xf32> to vector<8x32xf32>
    %179 = vector.extract_strided_slice %175 {offsets = [0, 32], sizes = [8, 32], strides = [1, 1]} : vector<8x96xf32> to vector<8x32xf32>
    %180 = vector.extract_strided_slice %175 {offsets = [0, 64], sizes = [8, 32], strides = [1, 1]} : vector<8x96xf32> to vector<8x32xf32>
    %181 = arith.mulf %179, %145 : vector<8x32xf32>
    %182 = arith.mulf %178, %177 : vector<8x32xf32>
    %183 = arith.addf %181, %182 : vector<8x32xf32>
    %184 = math.tanh %183 : vector<8x32xf32>
    %185 = arith.mulf %180, %184 : vector<8x32xf32>
    %186 = tpu.concatenate %185, %166 in 1 : vector<8x32xf32>, vector<8x32xf32> -> vector<8x64xf32>
    %cst_33 = arith.constant dense<0.000000e+00> : vector<8x128xf32>
    %187 = tpu.matmul %186, %1, %cst_33 {dimension_numbers = #tpu.dot_dimension_numbers<[1], [0], [0], [1], [0, 0, 1, 1], [], []>} : vector<8x64xf32>, vector<64x128xf32>, vector<8x128xf32> -> vector<8x128xf32>
    %188 = arith.addf %187, %4 : vector<8x128xf32>
    %189 = vector.extract_strided_slice %188 {offsets = [0, 0], sizes = [8, 96], strides = [1, 1]} : vector<8x128xf32> to vector<8x96xf32>
    %190 = arith.negf %189 : vector<8x96xf32>
    %191 = math.exp %190 : vector<8x96xf32>
    %cst_34 = arith.constant 1.000000e+00 : f32
    %192 = vector.broadcast %cst_34 : f32 to vector<8x96xf32>
    %193 = arith.addf %192, %191 : vector<8x96xf32>
    %194 = arith.divf %192, %193 : vector<8x96xf32>
    %195 = vector.extract_strided_slice %188 {offsets = [0, 96], sizes = [8, 32], strides = [1, 1]} : vector<8x128xf32> to vector<8x32xf32>
    %196 = math.tanh %195 : vector<8x32xf32>
    %197 = vector.extract_strided_slice %194 {offsets = [0, 0], sizes = [8, 32], strides = [1, 1]} : vector<8x96xf32> to vector<8x32xf32>
    %198 = vector.extract_strided_slice %194 {offsets = [0, 32], sizes = [8, 32], strides = [1, 1]} : vector<8x96xf32> to vector<8x32xf32>
    %199 = vector.extract_strided_slice %194 {offsets = [0, 64], sizes = [8, 32], strides = [1, 1]} : vector<8x96xf32> to vector<8x32xf32>
    %200 = arith.mulf %198, %164 : vector<8x32xf32>
    %201 = arith.mulf %197, %196 : vector<8x32xf32>
    %202 = arith.addf %200, %201 : vector<8x32xf32>
    %203 = math.tanh %202 : vector<8x32xf32>
    %204 = arith.mulf %199, %203 : vector<8x32xf32>
    %205 = vector.extract_strided_slice %10 {offsets = [40, 0], sizes = [8, 128], strides = [1, 1]} : vector<64x128xf32> to vector<8x128xf32>
    %cst_35 = arith.constant dense<0.000000e+00> : vector<8x128xf32>
    %206 = tpu.matmul %185, %0, %cst_35 {dimension_numbers = #tpu.dot_dimension_numbers<[1], [0], [0], [1], [0, 0, 1, 1], [], []>} : vector<8x32xf32>, vector<32x128xf32>, vector<8x128xf32> -> vector<8x128xf32>
    %207 = arith.addf %205, %206 : vector<8x128xf32>
    %208 = vector.extract_strided_slice %207 {offsets = [0, 0], sizes = [8, 96], strides = [1, 1]} : vector<8x128xf32> to vector<8x96xf32>
    %209 = arith.negf %208 : vector<8x96xf32>
    %210 = math.exp %209 : vector<8x96xf32>
    %cst_36 = arith.constant 1.000000e+00 : f32
    %211 = vector.broadcast %cst_36 : f32 to vector<8x96xf32>
    %212 = arith.addf %211, %210 : vector<8x96xf32>
    %213 = arith.divf %211, %212 : vector<8x96xf32>
    %214 = vector.extract_strided_slice %207 {offsets = [0, 96], sizes = [8, 32], strides = [1, 1]} : vector<8x128xf32> to vector<8x32xf32>
    %215 = math.tanh %214 : vector<8x32xf32>
    %216 = vector.extract_strided_slice %213 {offsets = [0, 0], sizes = [8, 32], strides = [1, 1]} : vector<8x96xf32> to vector<8x32xf32>
    %217 = vector.extract_strided_slice %213 {offsets = [0, 32], sizes = [8, 32], strides = [1, 1]} : vector<8x96xf32> to vector<8x32xf32>
    %218 = vector.extract_strided_slice %213 {offsets = [0, 64], sizes = [8, 32], strides = [1, 1]} : vector<8x96xf32> to vector<8x32xf32>
    %219 = arith.mulf %217, %183 : vector<8x32xf32>
    %220 = arith.mulf %216, %215 : vector<8x32xf32>
    %221 = arith.addf %219, %220 : vector<8x32xf32>
    %222 = math.tanh %221 : vector<8x32xf32>
    %223 = arith.mulf %218, %222 : vector<8x32xf32>
    %224 = tpu.concatenate %223, %204 in 1 : vector<8x32xf32>, vector<8x32xf32> -> vector<8x64xf32>
    %cst_37 = arith.constant dense<0.000000e+00> : vector<8x128xf32>
    %225 = tpu.matmul %224, %1, %cst_37 {dimension_numbers = #tpu.dot_dimension_numbers<[1], [0], [0], [1], [0, 0, 1, 1], [], []>} : vector<8x64xf32>, vector<64x128xf32>, vector<8x128xf32> -> vector<8x128xf32>
    %226 = arith.addf %225, %4 : vector<8x128xf32>
    %227 = vector.extract_strided_slice %226 {offsets = [0, 0], sizes = [8, 96], strides = [1, 1]} : vector<8x128xf32> to vector<8x96xf32>
    %228 = arith.negf %227 : vector<8x96xf32>
    %229 = math.exp %228 : vector<8x96xf32>
    %cst_38 = arith.constant 1.000000e+00 : f32
    %230 = vector.broadcast %cst_38 : f32 to vector<8x96xf32>
    %231 = arith.addf %230, %229 : vector<8x96xf32>
    %232 = arith.divf %230, %231 : vector<8x96xf32>
    %233 = vector.extract_strided_slice %226 {offsets = [0, 96], sizes = [8, 32], strides = [1, 1]} : vector<8x128xf32> to vector<8x32xf32>
    %234 = math.tanh %233 : vector<8x32xf32>
    %235 = vector.extract_strided_slice %232 {offsets = [0, 0], sizes = [8, 32], strides = [1, 1]} : vector<8x96xf32> to vector<8x32xf32>
    %236 = vector.extract_strided_slice %232 {offsets = [0, 32], sizes = [8, 32], strides = [1, 1]} : vector<8x96xf32> to vector<8x32xf32>
    %237 = vector.extract_strided_slice %232 {offsets = [0, 64], sizes = [8, 32], strides = [1, 1]} : vector<8x96xf32> to vector<8x32xf32>
    %238 = arith.mulf %236, %202 : vector<8x32xf32>
    %239 = arith.mulf %235, %234 : vector<8x32xf32>
    %240 = arith.addf %238, %239 : vector<8x32xf32>
    %241 = math.tanh %240 : vector<8x32xf32>
    %242 = arith.mulf %237, %241 : vector<8x32xf32>
    %243 = vector.extract_strided_slice %10 {offsets = [48, 0], sizes = [8, 128], strides = [1, 1]} : vector<64x128xf32> to vector<8x128xf32>
    %cst_39 = arith.constant dense<0.000000e+00> : vector<8x128xf32>
    %244 = tpu.matmul %223, %0, %cst_39 {dimension_numbers = #tpu.dot_dimension_numbers<[1], [0], [0], [1], [0, 0, 1, 1], [], []>} : vector<8x32xf32>, vector<32x128xf32>, vector<8x128xf32> -> vector<8x128xf32>
    %245 = arith.addf %243, %244 : vector<8x128xf32>
    %246 = vector.extract_strided_slice %245 {offsets = [0, 0], sizes = [8, 96], strides = [1, 1]} : vector<8x128xf32> to vector<8x96xf32>
    %247 = arith.negf %246 : vector<8x96xf32>
    %248 = math.exp %247 : vector<8x96xf32>
    %cst_40 = arith.constant 1.000000e+00 : f32
    %249 = vector.broadcast %cst_40 : f32 to vector<8x96xf32>
    %250 = arith.addf %249, %248 : vector<8x96xf32>
    %251 = arith.divf %249, %250 : vector<8x96xf32>
    %252 = vector.extract_strided_slice %245 {offsets = [0, 96], sizes = [8, 32], strides = [1, 1]} : vector<8x128xf32> to vector<8x32xf32>
    %253 = math.tanh %252 : vector<8x32xf32>
    %254 = vector.extract_strided_slice %251 {offsets = [0, 0], sizes = [8, 32], strides = [1, 1]} : vector<8x96xf32> to vector<8x32xf32>
    %255 = vector.extract_strided_slice %251 {offsets = [0, 32], sizes = [8, 32], strides = [1, 1]} : vector<8x96xf32> to vector<8x32xf32>
    %256 = vector.extract_strided_slice %251 {offsets = [0, 64], sizes = [8, 32], strides = [1, 1]} : vector<8x96xf32> to vector<8x32xf32>
    %257 = arith.mulf %255, %221 : vector<8x32xf32>
    %258 = arith.mulf %254, %253 : vector<8x32xf32>
    %259 = arith.addf %257, %258 : vector<8x32xf32>
    %260 = math.tanh %259 : vector<8x32xf32>
    %261 = arith.mulf %256, %260 : vector<8x32xf32>
    %262 = tpu.concatenate %261, %242 in 1 : vector<8x32xf32>, vector<8x32xf32> -> vector<8x64xf32>
    %cst_41 = arith.constant dense<0.000000e+00> : vector<8x128xf32>
    %263 = tpu.matmul %262, %1, %cst_41 {dimension_numbers = #tpu.dot_dimension_numbers<[1], [0], [0], [1], [0, 0, 1, 1], [], []>} : vector<8x64xf32>, vector<64x128xf32>, vector<8x128xf32> -> vector<8x128xf32>
    %264 = arith.addf %263, %4 : vector<8x128xf32>
    %265 = vector.extract_strided_slice %264 {offsets = [0, 0], sizes = [8, 96], strides = [1, 1]} : vector<8x128xf32> to vector<8x96xf32>
    %266 = arith.negf %265 : vector<8x96xf32>
    %267 = math.exp %266 : vector<8x96xf32>
    %cst_42 = arith.constant 1.000000e+00 : f32
    %268 = vector.broadcast %cst_42 : f32 to vector<8x96xf32>
    %269 = arith.addf %268, %267 : vector<8x96xf32>
    %270 = arith.divf %268, %269 : vector<8x96xf32>
    %271 = vector.extract_strided_slice %264 {offsets = [0, 96], sizes = [8, 32], strides = [1, 1]} : vector<8x128xf32> to vector<8x32xf32>
    %272 = math.tanh %271 : vector<8x32xf32>
    %273 = vector.extract_strided_slice %270 {offsets = [0, 0], sizes = [8, 32], strides = [1, 1]} : vector<8x96xf32> to vector<8x32xf32>
    %274 = vector.extract_strided_slice %270 {offsets = [0, 32], sizes = [8, 32], strides = [1, 1]} : vector<8x96xf32> to vector<8x32xf32>
    %275 = vector.extract_strided_slice %270 {offsets = [0, 64], sizes = [8, 32], strides = [1, 1]} : vector<8x96xf32> to vector<8x32xf32>
    %276 = arith.mulf %274, %240 : vector<8x32xf32>
    %277 = arith.mulf %273, %272 : vector<8x32xf32>
    %278 = arith.addf %276, %277 : vector<8x32xf32>
    %279 = math.tanh %278 : vector<8x32xf32>
    %280 = arith.mulf %275, %279 : vector<8x32xf32>
    %281 = vector.extract_strided_slice %10 {offsets = [56, 0], sizes = [8, 128], strides = [1, 1]} : vector<64x128xf32> to vector<8x128xf32>
    %cst_43 = arith.constant dense<0.000000e+00> : vector<8x128xf32>
    %282 = tpu.matmul %261, %0, %cst_43 {dimension_numbers = #tpu.dot_dimension_numbers<[1], [0], [0], [1], [0, 0, 1, 1], [], []>} : vector<8x32xf32>, vector<32x128xf32>, vector<8x128xf32> -> vector<8x128xf32>
    %283 = arith.addf %281, %282 : vector<8x128xf32>
    %284 = vector.extract_strided_slice %283 {offsets = [0, 0], sizes = [8, 96], strides = [1, 1]} : vector<8x128xf32> to vector<8x96xf32>
    %285 = arith.negf %284 : vector<8x96xf32>
    %286 = math.exp %285 : vector<8x96xf32>
    %cst_44 = arith.constant 1.000000e+00 : f32
    %287 = vector.broadcast %cst_44 : f32 to vector<8x96xf32>
    %288 = arith.addf %287, %286 : vector<8x96xf32>
    %289 = arith.divf %287, %288 : vector<8x96xf32>
    %290 = vector.extract_strided_slice %283 {offsets = [0, 96], sizes = [8, 32], strides = [1, 1]} : vector<8x128xf32> to vector<8x32xf32>
    %291 = math.tanh %290 : vector<8x32xf32>
    %292 = vector.extract_strided_slice %289 {offsets = [0, 0], sizes = [8, 32], strides = [1, 1]} : vector<8x96xf32> to vector<8x32xf32>
    %293 = vector.extract_strided_slice %289 {offsets = [0, 32], sizes = [8, 32], strides = [1, 1]} : vector<8x96xf32> to vector<8x32xf32>
    %294 = vector.extract_strided_slice %289 {offsets = [0, 64], sizes = [8, 32], strides = [1, 1]} : vector<8x96xf32> to vector<8x32xf32>
    %295 = arith.mulf %293, %259 : vector<8x32xf32>
    %296 = arith.mulf %292, %291 : vector<8x32xf32>
    %297 = arith.addf %295, %296 : vector<8x32xf32>
    %298 = math.tanh %297 : vector<8x32xf32>
    %299 = arith.mulf %294, %298 : vector<8x32xf32>
    %300 = tpu.concatenate %299, %280 in 1 : vector<8x32xf32>, vector<8x32xf32> -> vector<8x64xf32>
    %cst_45 = arith.constant dense<0.000000e+00> : vector<8x128xf32>
    %301 = tpu.matmul %300, %1, %cst_45 {dimension_numbers = #tpu.dot_dimension_numbers<[1], [0], [0], [1], [0, 0, 1, 1], [], []>} : vector<8x64xf32>, vector<64x128xf32>, vector<8x128xf32> -> vector<8x128xf32>
    %302 = arith.addf %301, %4 : vector<8x128xf32>
    %303 = vector.extract_strided_slice %302 {offsets = [0, 0], sizes = [8, 96], strides = [1, 1]} : vector<8x128xf32> to vector<8x96xf32>
    %304 = arith.negf %303 : vector<8x96xf32>
    %305 = math.exp %304 : vector<8x96xf32>
    %cst_46 = arith.constant 1.000000e+00 : f32
    %306 = vector.broadcast %cst_46 : f32 to vector<8x96xf32>
    %307 = arith.addf %306, %305 : vector<8x96xf32>
    %308 = arith.divf %306, %307 : vector<8x96xf32>
    %309 = vector.extract_strided_slice %302 {offsets = [0, 96], sizes = [8, 32], strides = [1, 1]} : vector<8x128xf32> to vector<8x32xf32>
    %310 = math.tanh %309 : vector<8x32xf32>
    %311 = vector.extract_strided_slice %308 {offsets = [0, 0], sizes = [8, 32], strides = [1, 1]} : vector<8x96xf32> to vector<8x32xf32>
    %312 = vector.extract_strided_slice %308 {offsets = [0, 32], sizes = [8, 32], strides = [1, 1]} : vector<8x96xf32> to vector<8x32xf32>
    %313 = vector.extract_strided_slice %308 {offsets = [0, 64], sizes = [8, 32], strides = [1, 1]} : vector<8x96xf32> to vector<8x32xf32>
    %314 = arith.mulf %312, %278 : vector<8x32xf32>
    %315 = arith.mulf %311, %310 : vector<8x32xf32>
    %316 = arith.addf %314, %315 : vector<8x32xf32>
    %317 = math.tanh %316 : vector<8x32xf32>
    %318 = arith.mulf %313, %317 : vector<8x32xf32>
    %c0_47 = arith.constant 0 : index
    %c0_48 = arith.constant 0 : index
    %319 = vector.load %arg6[%c0_47, %c0_48] : memref<32x4xf32, #tpu.memory_space<vmem>>, vector<32x4xf32>
    %cst_49 = arith.constant dense<0.000000e+00> : vector<8x4xf32>
    %320 = tpu.matmul %318, %319, %cst_49 {dimension_numbers = #tpu.dot_dimension_numbers<[1], [0], [0], [1], [0, 0, 1, 1], [], []>} : vector<8x32xf32>, vector<32x4xf32>, vector<8x4xf32> -> vector<8x4xf32>
    %c0_50 = arith.constant 0 : index
    %c0_51 = arith.constant 0 : index
    %321 = vector.load %arg7[%c0_50, %c0_51] : memref<1x4xf32, #tpu.memory_space<vmem>>, vector<1x4xf32>
    %322 = vector.broadcast %321 : vector<1x4xf32> to vector<8x4xf32>
    %323 = arith.addf %320, %322 : vector<8x4xf32>
    %c0_52 = arith.constant 0 : index
    %c0_53 = arith.constant 0 : index
    %324 = vector.load %arg8[%c0_52, %c0_53] : memref<8x4xf32, #tpu.memory_space<vmem>>, vector<8x4xf32>
    tpu.vector_store %arg8[%c0_52, %c0_53], %323 {strides = array<i32>} : memref<8x4xf32, #tpu.memory_space<vmem>>, vector<8x4xf32>,
    return
  }
}

</mosaic_0001>

<llo_original>
// kernel: _lstm_net_forward_impl.1
$region0: #{_lstm_net_forward_impl.1}
  #allocation0 [shape = 'u32[]', space=smem, size = 0x4, offset = 0x4, fixed_abs, tag = 'smem constant byte address 0x4 - core index']
  #allocation1 [shape = 'u32[144,128]{1,0:T(1,128)}', space=vmem, size = 0x12000, scoped, tag = 'internal scratch']
  %s0 = inlined_call_operand.vmem [shape: f32[64,16], index: 0, kind: input, shape index: {}]
  %s1 = inlined_call_operand.vmem [shape: f32[16,128], index: 1, kind: input, shape index: {}]
  %s2 = inlined_call_operand.vmem [shape: f32[32,128], index: 2, kind: input, shape index: {}]
  %s3 = inlined_call_operand.vmem [shape: f32[1,128], index: 3, kind: input, shape index: {}]
  %s4 = inlined_call_operand.vmem [shape: f32[64,128], index: 4, kind: input, shape index: {}]
  %s5 = inlined_call_operand.vmem [shape: f32[1,128], index: 5, kind: input, shape index: {}]
  %s6 = inlined_call_operand.vmem [shape: f32[32,4], index: 6, kind: input, shape index: {}]
  %s7 = inlined_call_operand.vmem [shape: f32[1,4], index: 7, kind: input, shape index: {}]
  %s8 = inlined_call_operand.vmem [shape: f32[8,4], index: 8, kind: output, shape index: {}]
  %s9 = sld [smem:[#allocation0]]
  $region42: #{_lstm_net_forward_impl.1} parent=0
    _
  %s11 = ssub.s32 1, %s9
  %s12 = scalar_select 0, %s11, %s9
  // Predicated region
  $region2: #{_lstm_net_forward_impl.1} parent=0 // pred_check
    _
  $region3: #{_lstm_net_forward_impl.1} parent=0 // pred_check_branch
    %14 = sbr.rel (0) target = $region5
  $region4: #{_lstm_net_forward_impl.1} parent=0 // pred_region
    _
  $region5: #{_lstm_net_forward_impl.1} parent=0 // pred_fallthru
    _
  // Predicated region
  $region6: #{_lstm_net_forward_impl.1} parent=0 // pred_check
    _
  $region7: #{_lstm_net_forward_impl.1} parent=0 // pred_check_branch
    %16 = sbr.rel (0) target = $region9
  $region8: #{_lstm_net_forward_impl.1} parent=0 // pred_region
    _
  $region9: #{_lstm_net_forward_impl.1} parent=0 // pred_fallthru
    _
  // Predicated region
  $region10: #{_lstm_net_forward_impl.1} parent=0 // pred_check
    _
  $region11: #{_lstm_net_forward_impl.1} parent=0 // pred_check_branch
    %18 = sbr.rel (0) target = $region13
  $region12: #{_lstm_net_forward_impl.1} parent=0 // pred_region
    _
  $region13: #{_lstm_net_forward_impl.1} parent=0 // pred_fallthru
    _
  // Predicated region
  $region14: #{_lstm_net_forward_impl.1} parent=0 // pred_check
    _
  $region15: #{_lstm_net_forward_impl.1} parent=0 // pred_check_branch
    %20 = sbr.rel (0) target = $region17
  $region16: #{_lstm_net_forward_impl.1} parent=0 // pred_region
    _
  $region17: #{_lstm_net_forward_impl.1} parent=0 // pred_fallthru
    _
  // Predicated region
  $region18: #{_lstm_net_forward_impl.1} parent=0 // pred_check
    _
  $region19: #{_lstm_net_forward_impl.1} parent=0 // pred_check_branch
    %22 = sbr.rel (0) target = $region21
  $region20: #{_lstm_net_forward_impl.1} parent=0 // pred_region
    _
  $region21: #{_lstm_net_forward_impl.1} parent=0 // pred_fallthru
    _
  // Predicated region
  $region22: #{_lstm_net_forward_impl.1} parent=0 // pred_check
    _
  $region23: #{_lstm_net_forward_impl.1} parent=0 // pred_check_branch
    %24 = sbr.rel (0) target = $region25
  $region24: #{_lstm_net_forward_impl.1} parent=0 // pred_region
    _
  $region25: #{_lstm_net_forward_impl.1} parent=0 // pred_fallthru
    _
  // Predicated region
  $region26: #{_lstm_net_forward_impl.1} parent=0 // pred_check
    _
  $region27: #{_lstm_net_forward_impl.1} parent=0 // pred_check_branch
    %26 = sbr.rel (0) target = $region29
  $region28: #{_lstm_net_forward_impl.1} parent=0 // pred_region
    _
  $region29: #{_lstm_net_forward_impl.1} parent=0 // pred_fallthru
    _
  // Predicated region
  $region30: #{_lstm_net_forward_impl.1} parent=0 // pred_check
    _
  $region31: #{_lstm_net_forward_impl.1} parent=0 // pred_check_branch
    %28 = sbr.rel (0) target = $region33
  $region32: #{_lstm_net_forward_impl.1} parent=0 // pred_region
    _
  $region33: #{_lstm_net_forward_impl.1} parent=0 // pred_fallthru
    _
  %v29 = vld [vmem:[%s2] sm:$0xff]
  %v30 = vld [vmem:[%s2 + $0x8] sm:$0xff]
  %v31 = vld [vmem:[%s2 + $0x10] sm:$0xff]
  %v32 = vld [vmem:[%s2 + $0x18] sm:$0xff]
  %v33 = vld [vmem:[%s4] sm:$0xff]
  %v34 = vld [vmem:[%s4 + $0x8] sm:$0xff]
  %v35 = vld [vmem:[%s4 + $0x10] sm:$0xff]
  %v36 = vld [vmem:[%s4 + $0x18] sm:$0xff]
  %v37 = vld [vmem:[%s4 + $0x20] sm:$0xff]
  %v38 = vld [vmem:[%s4 + $0x28] sm:$0xff]
  %v39 = vld [vmem:[%s4 + $0x30] sm:$0xff]
  %v40 = vld [vmem:[%s4 + $0x38] sm:$0xff]
  %v41 = vld [vmem:[%s5] sm:$0x1]
  %v43 = vlaneseq
  %v44 = vshrl.u32 %v43, 7
  %v45 = vsub.s32 0, %v44
  %v46 = vrot.slane %v41, %v45
  %v48 = vld [vmem:[%s0] sm:$0xff]
  %v49 = vld [vmem:[%s0 + $0x8] sm:$0xff]
  %v50 = vld [vmem:[%s0 + $0x10] sm:$0xff]
  %v51 = vld [vmem:[%s0 + $0x18] sm:$0xff]
  %v52 = vld [vmem:[%s0 + $0x20] sm:$0xff]
  %v53 = vld [vmem:[%s0 + $0x28] sm:$0xff]
  %v54 = vld [vmem:[%s0 + $0x30] sm:$0xff]
  %v55 = vld [vmem:[%s0 + $0x38] sm:$0xff]
  %v56 = vld [vmem:[%s1] sm:$0xff]
  %v57 = vld [vmem:[%s1 + $0x8] sm:$0xff]
  %v58 = vld [vmem:[%s3] sm:$0x1]
  %v60 = vlaneseq
  %v61 = vshrl.u32 %v60, 7
  %v62 = vsub.s32 0, %v61
  %v63 = vrot.slane %v58, %v62
  %vm65 = vcmask 130048
  %v67 = vsel %vm65, %v48, 0
  %v70 = vsel %vm65, %v49, 0
  %v73 = vsel %vm65, %v50, 0
  %v76 = vsel %vm65, %v51, 0
  %v79 = vsel %vm65, %v52, 0
  %v82 = vsel %vm65, %v53, 0
  %v85 = vsel %vm65, %v54, 0
  %v88 = vsel %vm65, %v55, 0
  %90 = vmatprep.subr.mxu0 0.0
  %91 = vmatpush1.msra.mxu0 %v56
  %92 = vmatprep.subr.mxu0 0.0
  %93 = vmatpush1.msra.mxu0 %v57
  %94 = vmatprep.subr.mxu0 0.0
  %95 = vmatpush1.msra.mxu0 0.0
  %96 = vmatprep.subr.mxu0 0.0
  %97 = vmatpush1.msra.mxu0 0.0
  %98 = vmatprep.subr.mxu0 0.0
  %99 = vmatpush1.msra.mxu0 0.0
  %100 = vmatprep.subr.mxu0 0.0
  %101 = vmatpush1.msra.mxu0 0.0
  %102 = vmatprep.subr.mxu0 0.0
  %103 = vmatpush1.msra.mxu0 0.0
  %104 = vmatprep.subr.mxu0 0.0
  %105 = vmatpush1.msra.mxu0 0.0
  %106 = vmatprep.subr.mxu0 0.0
  %107 = vmatpush1.msra.mxu0 0.0
  %108 = vmatprep.subr.mxu0 0.0
  %109 = vmatpush1.msra.mxu0 0.0
  %110 = vmatprep.subr.mxu0 0.0
  %111 = vmatpush1.msra.mxu0 0.0
  %112 = vmatprep.subr.mxu0 0.0
  %113 = vmatpush1.msra.mxu0 0.0
  %114 = vmatprep.subr.mxu0 0.0
  %115 = vmatpush1.msra.mxu0 0.0
  %116 = vmatprep.subr.mxu0 0.0
  %117 = vmatpush1.msra.mxu0 0.0
  %118 = vmatprep.subr.mxu0 0.0
  %119 = vmatpush1.msra.mxu0 0.0
  %120 = vmatprep.subr.mxu0 0.0
  %121 = vmatpush1.msra.mxu0 0.0
  %122 = vmatprep.subr.mxu0 0.0
  %123 = vmatpush1.msra.mxu0 0.0
  %124 = vmatprep.subr.mxu0 0.0
  %125 = vmatpush1.msra.mxu0 0.0
  %126 = vmatprep.subr.mxu0 0.0
  %127 = vmatpush1.msra.mxu0 0.0
  %128 = vmatprep.subr.mxu0 0.0
  %129 = vmatpush1.msra.mxu0 0.0
  %130 = vmatprep.subr.mxu0 0.0
  %131 = vmatpush1.msra.mxu0 0.0
  %132 = vmatprep.subr.mxu0 0.0
  %133 = vmatpush1.msra.mxu0 0.0
  %134 = vmatprep.subr.mxu0 0.0
  %135 = vmatpush1.msra.mxu0 0.0
  %136 = vmatprep.subr.mxu0 0.0
  %137 = vmatpush1.msra.mxu0 0.0
  %138 = vmatprep.subr.mxu0 0.0
  %139 = vmatpush1.msra.mxu0 0.0
  %140 = vmatprep.subr.mxu0 0.0
  %141 = vmatpush1.msra.mxu0 0.0
  %142 = vmatprep.subr.mxu0 0.0
  %143 = vmatpush1.msra.mxu0 0.0
  %144 = vmatprep.subr.mxu0 0.0
  %145 = vmatpush1.msra.mxu0 0.0
  %146 = vmatprep.subr.mxu0 0.0
  %147 = vmatpush1.msra.mxu0 0.0
  %148 = vmatprep.subr.mxu0 0.0
  %149 = vmatpush1.msra.mxu0 0.0
  %150 = vmatprep.subr.mxu0 0.0
  %151 = vmatpush1.msra.mxu0 0.0
  %152 = vmatprep.subr.mxu0 0.0
  %153 = vmatpush1.msra.mxu0 0.0
  %154 = vmatprep.mubr.f32.mxu0 0.0
  %155 = vmatmul.mubr.f32.gmra.mrb[0].mxu0 %v67
  %v156 = vpop.f32.mrb[0].mxu0
  %v157 = vadd.f32 %v63, %v156
  %v158 = vpop.f32.mrb[0].mxu0
  %159 = vmatprep.mubr.f32.mxu0 0.0
  %160 = vmatmul.mubr.f32.gmra.mrb[0].mxu0 %v70
  %v161 = vpop.f32.mrb[0].mxu0
  %v162 = vadd.f32 %v63, %v161
  %v163 = vpop.f32.mrb[0].mxu0
  %164 = vmatprep.mubr.f32.mxu0 0.0
  %165 = vmatmul.mubr.f32.gmra.mrb[0].mxu0 %v73
  %v166 = vpop.f32.mrb[0].mxu0
  %v167 = vadd.f32 %v63, %v166
  %v168 = vpop.f32.mrb[0].mxu0
  %169 = vmatprep.mubr.f32.mxu0 0.0
  %170 = vmatmul.mubr.f32.gmra.mrb[0].mxu0 %v76
  %v171 = vpop.f32.mrb[0].mxu0
  %v172 = vadd.f32 %v63, %v171
  %v173 = vpop.f32.mrb[0].mxu0
  %174 = vmatprep.mubr.f32.mxu0 0.0
  %175 = vmatmul.mubr.f32.gmra.mrb[0].mxu0 %v79
  %v176 = vpop.f32.mrb[0].mxu0
  %v177 = vadd.f32 %v63, %v176
  %v178 = vpop.f32.mrb[0].mxu0
  %179 = vmatprep.mubr.f32.mxu0 0.0
  %180 = vmatmul.mubr.f32.gmra.mrb[0].mxu0 %v82
  %v181 = vpop.f32.mrb[0].mxu0
  %v182 = vadd.f32 %v63, %v181
  %v183 = vpop.f32.mrb[0].mxu0
  %184 = vmatprep.mubr.f32.mxu0 0.0
  %185 = vmatmul.mubr.f32.gmra.mrb[0].mxu0 %v85
  %v186 = vpop.f32.mrb[0].mxu0
  %v187 = vadd.f32 %v63, %v186
  %v188 = vpop.f32.mrb[0].mxu0
  %189 = vmatprep.mubr.f32.mxu0 0.0
  %190 = vmatmul.mubr.f32.gmra.mrb[0].mxu0 %v88
  %v191 = vpop.f32.mrb[0].mxu0
  %v192 = vadd.f32 %v63, %v191
  %v193 = vpop.f32.mrb[0].mxu0
  %194 = vdwg.mxu0
  %vm195 = vcmask 261120
  %v197 = vsel %vm195, 0.0, 0
  %199 = vmatprep.subr.mxu0 0.0
  %200 = vmatpush1.msra.mxu0 %v29
  %201 = vmatprep.subr.mxu0 0.0
  %202 = vmatpush1.msra.mxu0 %v30
  %203 = vmatprep.subr.mxu0 0.0
  %204 = vmatpush1.msra.mxu0 %v31
  %205 = vmatprep.subr.mxu0 0.0
  %206 = vmatpush1.msra.mxu0 %v32
  %207 = vmatprep.subr.mxu0 0.0
  %208 = vmatpush1.msra.mxu0 0.0
  %209 = vmatprep.subr.mxu0 0.0
  %210 = vmatpush1.msra.mxu0 0.0
  %211 = vmatprep.subr.mxu0 0.0
  %212 = vmatpush1.msra.mxu0 0.0
  %213 = vmatprep.subr.mxu0 0.0
  %214 = vmatpush1.msra.mxu0 0.0
  %215 = vmatprep.subr.mxu0 0.0
  %216 = vmatpush1.msra.mxu0 0.0
  %217 = vmatprep.subr.mxu0 0.0
  %218 = vmatpush1.msra.mxu0 0.0
  %219 = vmatprep.subr.mxu0 0.0
  %220 = vmatpush1.msra.mxu0 0.0
  %221 = vmatprep.subr.mxu0 0.0
  %222 = vmatpush1.msra.mxu0 0.0
  %223 = vmatprep.subr.mxu0 0.0
  %224 = vmatpush1.msra.mxu0 0.0
  %225 = vmatprep.subr.mxu0 0.0
  %226 = vmatpush1.msra.mxu0 0.0
  %227 = vmatprep.subr.mxu0 0.0
  %228 = vmatpush1.msra.mxu0 0.0
  %229 = vmatprep.subr.mxu0 0.0
  %230 = vmatpush1.msra.mxu0 0.0
  %231 = vmatprep.subr.mxu0 0.0
  %232 = vmatpush1.msra.mxu0 0.0
  %233 = vmatprep.subr.mxu0 0.0
  %234 = vmatpush1.msra.mxu0 0.0
  %235 = vmatprep.subr.mxu0 0.0
  %236 = vmatpush1.msra.mxu0 0.0
  %237 = vmatprep.subr.mxu0 0.0
  %238 = vmatpush1.msra.mxu0 0.0
  %239 = vmatprep.subr.mxu0 0.0
  %240 = vmatpush1.msra.mxu0 0.0
  %241 = vmatprep.subr.mxu0 0.0
  %242 = vmatpush1.msra.mxu0 0.0
  %243 = vmatprep.subr.mxu0 0.0
  %244 = vmatpush1.msra.mxu0 0.0
  %245 = vmatprep.subr.mxu0 0.0
  %246 = vmatpush1.msra.mxu0 0.0
  %247 = vmatprep.subr.mxu0 0.0
  %248 = vmatpush1.msra.mxu0 0.0
  %249 = vmatprep.subr.mxu0 0.0
  %250 = vmatpush1.msra.mxu0 0.0
  %251 = vmatprep.subr.mxu0 0.0
  %252 = vmatpush1.msra.mxu0 0.0
  %253 = vmatprep.subr.mxu0 0.0
  %254 = vmatpush1.msra.mxu0 0.0
  %255 = vmatprep.subr.mxu0 0.0
  %256 = vmatpush1.msra.mxu0 0.0
  %257 = vmatprep.subr.mxu0 0.0
  %258 = vmatpush1.msra.mxu0 0.0
  %259 = vmatprep.subr.mxu0 0.0
  %260 = vmatpush1.msra.mxu0 0.0
  %261 = vmatprep.subr.mxu0 0.0
  %262 = vmatpush1.msra.mxu0 0.0
  %263 = vmatprep.mubr.f32.mxu0 0.0
  %264 = vmatmul.mubr.f32.gmra.mrb[0].mxu0 %v197
  %v265 = vpop.f32.mrb[0].mxu0
  %v266 = vadd.f32 0.0, %v265
  %v267 = vpop.f32.mrb[0].mxu0
  %268 = vdwg.mxu0
  %v269 = vadd.f32 %v157, %v266
  %v270 = vxor.u32 %v269, 2147483648
  %v271 = vmul.f32 %v270, 1.442695
  %v272 = vpow.pop %v271
  %v273 = vadd.f32 %v272, 1.0
  %v274 = vrcp.pop %v273
  %v275 = vmul.f32 1.0, %v274
  %v276 = vtanh.pop %v269
  %v277 = vmul.f32 %v275, 0.0
  %279 = vrot.lane.b32.xlu0 %v276, 32
  %v280 = vpop.permute.xlu0 %279
  %v282 = vmul.f32 %v275, %v280
  %284 = vrot.lane.b32.xlu0 %v282, 32
  %v285 = vpop.permute.xlu0 %284
  %v287 = vadd.f32 %v277, %v285
  %v288 = vtanh.pop %v287
  %290 = vrot.lane.b32.xlu0 %v288, 32
  %v291 = vpop.permute.xlu0 %290
  %v293 = vmul.f32 %v275, %v291
  %295 = vrot.lane.b32.xlu0 %v293, 64
  %v296 = vpop.permute.xlu0 %295
  %v298 = vsel %vm195, %v296, 0.0
  %vm299 = vcmask 523264
  %v301 = vsel %vm299, %v298, 0
  %303 = vmatprep.subr.mxu0 0.0
  %304 = vmatpush1.msra.mxu0 %v33
  %305 = vmatprep.subr.mxu0 0.0
  %306 = vmatpush1.msra.mxu0 %v34
  %307 = vmatprep.subr.mxu0 0.0
  %308 = vmatpush1.msra.mxu0 %v35
  %309 = vmatprep.subr.mxu0 0.0
  %310 = vmatpush1.msra.mxu0 %v36
  %311 = vmatprep.subr.mxu0 0.0
  %312 = vmatpush1.msra.mxu0 %v37
  %313 = vmatprep.subr.mxu0 0.0
  %314 = vmatpush1.msra.mxu0 %v38
  %315 = vmatprep.subr.mxu0 0.0
  %316 = vmatpush1.msra.mxu0 %v39
  %317 = vmatprep.subr.mxu0 0.0
  %318 = vmatpush1.msra.mxu0 %v40
  %319 = vmatprep.subr.mxu0 0.0
  %320 = vmatpush1.msra.mxu0 0.0
  %321 = vmatprep.subr.mxu0 0.0
  %322 = vmatpush1.msra.mxu0 0.0
  %323 = vmatprep.subr.mxu0 0.0
  %324 = vmatpush1.msra.mxu0 0.0
  %325 = vmatprep.subr.mxu0 0.0
  %326 = vmatpush1.msra.mxu0 0.0
  %327 = vmatprep.subr.mxu0 0.0
  %328 = vmatpush1.msra.mxu0 0.0
  %329 = vmatprep.subr.mxu0 0.0
  %330 = vmatpush1.msra.mxu0 0.0
  %331 = vmatprep.subr.mxu0 0.0
  %332 = vmatpush1.msra.mxu0 0.0
  %333 = vmatprep.subr.mxu0 0.0
  %334 = vmatpush1.msra.mxu0 0.0
  %335 = vmatprep.subr.mxu0 0.0
  %336 = vmatpush1.msra.mxu0 0.0
  %337 = vmatprep.subr.mxu0 0.0
  %338 = vmatpush1.msra.mxu0 0.0
  %339 = vmatprep.subr.mxu0 0.0
  %340 = vmatpush1.msra.mxu0 0.0
  %341 = vmatprep.subr.mxu0 0.0
  %342 = vmatpush1.msra.mxu0 0.0
  %343 = vmatprep.subr.mxu0 0.0
  %344 = vmatpush1.msra.mxu0 0.0
  %345 = vmatprep.subr.mxu0 0.0
  %346 = vmatpush1.msra.mxu0 0.0
  %347 = vmatprep.subr.mxu0 0.0
  %348 = vmatpush1.msra.mxu0 0.0
  %349 = vmatprep.subr.mxu0 0.0
  %350 = vmatpush1.msra.mxu0 0.0
  %351 = vmatprep.subr.mxu0 0.0
  %352 = vmatpush1.msra.mxu0 0.0
  %353 = vmatprep.subr.mxu0 0.0
  %354 = vmatpush1.msra.mxu0 0.0
  %355 = vmatprep.subr.mxu0 0.0
  %356 = vmatpush1.msra.mxu0 0.0
  %357 = vmatprep.subr.mxu0 0.0
  %358 = vmatpush1.msra.mxu0 0.0
  %359 = vmatprep.subr.mxu0 0.0
  %360 = vmatpush1.msra.mxu0 0.0
  %361 = vmatprep.subr.mxu0 0.0
  %362 = vmatpush1.msra.mxu0 0.0
  %363 = vmatprep.subr.mxu0 0.0
  %364 = vmatpush1.msra.mxu0 0.0
  %365 = vmatprep.subr.mxu0 0.0
  %366 = vmatpush1.msra.mxu0 0.0
  %367 = vmatprep.mubr.f32.mxu0 0.0
  %368 = vmatmul.mubr.f32.gmra.mrb[0].mxu0 %v301
  %v369 = vpop.f32.mrb[0].mxu0
  %v370 = vadd.f32 %v46, %v369
  %v371 = vpop.f32.mrb[0].mxu0
  %372 = vdwg.mxu0
  %v373 = vxor.u32 %v370, 2147483648
  %v374 = vmul.f32 %v373, 1.442695
  %v375 = vpow.pop %v374
  %v376 = vadd.f32 %v375, 1.0
  %v377 = vrcp.pop %v376
  %v378 = vmul.f32 1.0, %v377
  %v379 = vtanh.pop %v370
  %v380 = vmul.f32 %v378, 0.0
  %382 = vrot.lane.b32.xlu0 %v379, 32
  %v383 = vpop.permute.xlu0 %382
  %v385 = vmul.f32 %v378, %v383
  %387 = vrot.lane.b32.xlu0 %v385, 32
  %v388 = vpop.permute.xlu0 %387
  %v390 = vadd.f32 %v380, %v388
  %v391 = vtanh.pop %v390
  %393 = vrot.lane.b32.xlu0 %v391, 32
  %v394 = vpop.permute.xlu0 %393
  %v396 = vmul.f32 %v378, %v394
  %v397 = vsel %vm195, %v296, 0
  %399 = vmatprep.subr.mxu0 0.0
  %400 = vmatpush1.msra.mxu0 %v29
  %401 = vmatprep.subr.mxu0 0.0
  %402 = vmatpush1.msra.mxu0 %v30
  %403 = vmatprep.subr.mxu0 0.0
  %404 = vmatpush1.msra.mxu0 %v31
  %405 = vmatprep.subr.mxu0 0.0
  %406 = vmatpush1.msra.mxu0 %v32
  %407 = vmatprep.subr.mxu0 0.0
  %408 = vmatpush1.msra.mxu0 0.0
  %409 = vmatprep.subr.mxu0 0.0
  %410 = vmatpush1.msra.mxu0 0.0
  %411 = vmatprep.subr.mxu0 0.0
  %412 = vmatpush1.msra.mxu0 0.0
  %413 = vmatprep.subr.mxu0 0.0
  %414 = vmatpush1.msra.mxu0 0.0
  %415 = vmatprep.subr.mxu0 0.0
  %416 = vmatpush1.msra.mxu0 0.0
  %417 = vmatprep.subr.mxu0 0.0
  %418 = vmatpush1.msra.mxu0 0.0
  %419 = vmatprep.subr.mxu0 0.0
  %420 = vmatpush1.msra.mxu0 0.0
  %421 = vmatprep.subr.mxu0 0.0
  %422 = vmatpush1.msra.mxu0 0.0
  %423 = vmatprep.subr.mxu0 0.0
  %424 = vmatpush1.msra.mxu0 0.0
  %425 = vmatprep.subr.mxu0 0.0
  %426 = vmatpush1.msra.mxu0 0.0
  %427 = vmatprep.subr.mxu0 0.0
  %428 = vmatpush1.msra.mxu0 0.0
  %429 = vmatprep.subr.mxu0 0.0
  %430 = vmatpush1.msra.mxu0 0.0
  %431 = vmatprep.subr.mxu0 0.0
  %432 = vmatpush1.msra.mxu0 0.0
  %433 = vmatprep.subr.mxu0 0.0
  %434 = vmatpush1.msra.mxu0 0.0
  %435 = vmatprep.subr.mxu0 0.0
  %436 = vmatpush1.msra.mxu0 0.0
  %437 = vmatprep.subr.mxu0 0.0
  %438 = vmatpush1.msra.mxu0 0.0
  %439 = vmatprep.subr.mxu0 0.0
  %440 = vmatpush1.msra.mxu0 0.0
  %441 = vmatprep.subr.mxu0 0.0
  %442 = vmatpush1.msra.mxu0 0.0
  %443 = vmatprep.subr.mxu0 0.0
  %444 = vmatpush1.msra.mxu0 0.0
  %445 = vmatprep.subr.mxu0 0.0
  %446 = vmatpush1.msra.mxu0 0.0
  %447 = vmatprep.subr.mxu0 0.0
  %448 = vmatpush1.msra.mxu0 0.0
  %449 = vmatprep.subr.mxu0 0.0
  %450 = vmatpush1.msra.mxu0 0.0
  %451 = vmatprep.subr.mxu0 0.0
  %452 = vmatpush1.msra.mxu0 0.0
  %453 = vmatprep.subr.mxu0 0.0
  %454 = vmatpush1.msra.mxu0 0.0
  %455 = vmatprep.subr.mxu0 0.0
  %456 = vmatpush1.msra.mxu0 0.0
  %457 = vmatprep.subr.mxu0 0.0
  %458 = vmatpush1.msra.mxu0 0.0
  %459 = vmatprep.subr.mxu0 0.0
  %460 = vmatpush1.msra.mxu0 0.0
  %461 = vmatprep.subr.mxu0 0.0
  %462 = vmatpush1.msra.mxu0 0.0
  %463 = vmatprep.mubr.f32.mxu0 0.0
  %464 = vmatmul.mubr.f32.gmra.mrb[0].mxu0 %v397
  %v465 = vpop.f32.mrb[0].mxu0
  %v466 = vadd.f32 0.0, %v465
  %v467 = vpop.f32.mrb[0].mxu0
  %468 = vdwg.mxu0
  %v469 = vadd.f32 %v162, %v466
  %v470 = vxor.u32 %v469, 2147483648
  %v471 = vmul.f32 %v470, 1.442695
  %v472 = vpow.pop %v471
  %v473 = vadd.f32 %v472, 1.0
  %v474 = vrcp.pop %v473
  %v475 = vmul.f32 1.0, %v474
  %v476 = vtanh.pop %v469
  %v477 = vmul.f32 %v475, %v287
  %479 = vrot.lane.b32.xlu0 %v476, 32
  %v480 = vpop.permute.xlu0 %479
  %v482 = vmul.f32 %v475, %v480
  %484 = vrot.lane.b32.xlu0 %v482, 32
  %v485 = vpop.permute.xlu0 %484
  %v487 = vadd.f32 %v477, %v485
  %v488 = vtanh.pop %v487
  %490 = vrot.lane.b32.xlu0 %v488, 32
  %v491 = vpop.permute.xlu0 %490
  %v493 = vmul.f32 %v475, %v491
  %495 = vrot.lane.b32.xlu0 %v493, 64
  %v496 = vpop.permute.xlu0 %495
  %499 = vrot.lane.b32.xlu0 %v396, 96
  %v500 = vpop.permute.xlu0 %499
  %v502 = vsel %vm195, %v496, %v500
  %v504 = vsel %vm299, %v502, 0
  %506 = vmatprep.subr.mxu0 0.0
  %507 = vmatpush1.msra.mxu0 %v33
  %508 = vmatprep.subr.mxu0 0.0
  %509 = vmatpush1.msra.mxu0 %v34
  %510 = vmatprep.subr.mxu0 0.0
  %511 = vmatpush1.msra.mxu0 %v35
  %512 = vmatprep.subr.mxu0 0.0
  %513 = vmatpush1.msra.mxu0 %v36
  %514 = vmatprep.subr.mxu0 0.0
  %515 = vmatpush1.msra.mxu0 %v37
  %516 = vmatprep.subr.mxu0 0.0
  %517 = vmatpush1.msra.mxu0 %v38
  %518 = vmatprep.subr.mxu0 0.0
  %519 = vmatpush1.msra.mxu0 %v39
  %520 = vmatprep.subr.mxu0 0.0
  %521 = vmatpush1.msra.mxu0 %v40
  %522 = vmatprep.subr.mxu0 0.0
  %523 = vmatpush1.msra.mxu0 0.0
  %524 = vmatprep.subr.mxu0 0.0
  %525 = vmatpush1.msra.mxu0 0.0
  %526 = vmatprep.subr.mxu0 0.0
  %527 = vmatpush1.msra.mxu0 0.0
  %528 = vmatprep.subr.mxu0 0.0
  %529 = vmatpush1.msra.mxu0 0.0
  %530 = vmatprep.subr.mxu0 0.0
  %531 = vmatpush1.msra.mxu0 0.0
  %532 = vmatprep.subr.mxu0 0.0
  %533 = vmatpush1.msra.mxu0 0.0
  %534 = vmatprep.subr.mxu0 0.0
  %535 = vmatpush1.msra.mxu0 0.0
  %536 = vmatprep.subr.mxu0 0.0
  %537 = vmatpush1.msra.mxu0 0.0
  %538 = vmatprep.subr.mxu0 0.0
  %539 = vmatpush1.msra.mxu0 0.0
  %540 = vmatprep.subr.mxu0 0.0
  %541 = vmatpush1.msra.mxu0 0.0
  %542 = vmatprep.subr.mxu0 0.0
  %543 = vmatpush1.msra.mxu0 0.0
  %544 = vmatprep.subr.mxu0 0.0
  %545 = vmatpush1.msra.mxu0 0.0
  %546 = vmatprep.subr.mxu0 0.0
  %547 = vmatpush1.msra.mxu0 0.0
  %548 = vmatprep.subr.mxu0 0.0
  %549 = vmatpush1.msra.mxu0 0.0
  %550 = vmatprep.subr.mxu0 0.0
  %551 = vmatpush1.msra.mxu0 0.0
  %552 = vmatprep.subr.mxu0 0.0
  %553 = vmatpush1.msra.mxu0 0.0
  %554 = vmatprep.subr.mxu0 0.0
  %555 = vmatpush1.msra.mxu0 0.0
  %556 = vmatprep.subr.mxu0 0.0
  %557 = vmatpush1.msra.mxu0 0.0
  %558 = vmatprep.subr.mxu0 0.0
  %559 = vmatpush1.msra.mxu0 0.0
  %560 = vmatprep.subr.mxu0 0.0
  %561 = vmatpush1.msra.mxu0 0.0
  %562 = vmatprep.subr.mxu0 0.0
  %563 = vmatpush1.msra.mxu0 0.0
  %564 = vmatprep.subr.mxu0 0.0
  %565 = vmatpush1.msra.mxu0 0.0
  %566 = vmatprep.subr.mxu0 0.0
  %567 = vmatpush1.msra.mxu0 0.0
  %568 = vmatprep.subr.mxu0 0.0
  %569 = vmatpush1.msra.mxu0 0.0
  %570 = vmatprep.mubr.f32.mxu0 0.0
  %571 = vmatmul.mubr.f32.gmra.mrb[0].mxu0 %v504
  %v572 = vpop.f32.mrb[0].mxu0
  %v573 = vadd.f32 %v46, %v572
  %v574 = vpop.f32.mrb[0].mxu0
  %575 = vdwg.mxu0
  %v576 = vxor.u32 %v573, 2147483648
  %v577 = vmul.f32 %v576, 1.442695
  %v578 = vpow.pop %v577
  %v579 = vadd.f32 %v578, 1.0
  %v580 = vrcp.pop %v579
  %v581 = vmul.f32 1.0, %v580
  %v582 = vtanh.pop %v573
  %v583 = vmul.f32 %v581, %v390
  %585 = vrot.lane.b32.xlu0 %v582, 32
  %v586 = vpop.permute.xlu0 %585
  %v588 = vmul.f32 %v581, %v586
  %590 = vrot.lane.b32.xlu0 %v588, 32
  %v591 = vpop.permute.xlu0 %590
  %v593 = vadd.f32 %v583, %v591
  %v594 = vtanh.pop %v593
  %596 = vrot.lane.b32.xlu0 %v594, 32
  %v597 = vpop.permute.xlu0 %596
  %v599 = vmul.f32 %v581, %v597
  %v600 = vsel %vm195, %v496, 0
  %602 = vmatprep.subr.mxu0 0.0
  %603 = vmatpush1.msra.mxu0 %v29
  %604 = vmatprep.subr.mxu0 0.0
  %605 = vmatpush1.msra.mxu0 %v30
  %606 = vmatprep.subr.mxu0 0.0
  %607 = vmatpush1.msra.mxu0 %v31
  %608 = vmatprep.subr.mxu0 0.0
  %609 = vmatpush1.msra.mxu0 %v32
  %610 = vmatprep.subr.mxu0 0.0
  %611 = vmatpush1.msra.mxu0 0.0
  %612 = vmatprep.subr.mxu0 0.0
  %613 = vmatpush1.msra.mxu0 0.0
  %614 = vmatprep.subr.mxu0 0.0
  %615 = vmatpush1.msra.mxu0 0.0
  %616 = vmatprep.subr.mxu0 0.0
  %617 = vmatpush1.msra.mxu0 0.0
  %618 = vmatprep.subr.mxu0 0.0
  %619 = vmatpush1.msra.mxu0 0.0
  %620 = vmatprep.subr.mxu0 0.0
  %621 = vmatpush1.msra.mxu0 0.0
  %622 = vmatprep.subr.mxu0 0.0
  %623 = vmatpush1.msra.mxu0 0.0
  %624 = vmatprep.subr.mxu0 0.0
  %625 = vmatpush1.msra.mxu0 0.0
  %626 = vmatprep.subr.mxu0 0.0
  %627 = vmatpush1.msra.mxu0 0.0
  %628 = vmatprep.subr.mxu0 0.0
  %629 = vmatpush1.msra.mxu0 0.0
  %630 = vmatprep.subr.mxu0 0.0
  %631 = vmatpush1.msra.mxu0 0.0
  %632 = vmatprep.subr.mxu0 0.0
  %633 = vmatpush1.msra.mxu0 0.0
  %634 = vmatprep.subr.mxu0 0.0
  %635 = vmatpush1.msra.mxu0 0.0
  %636 = vmatprep.subr.mxu0 0.0
  %637 = vmatpush1.msra.mxu0 0.0
  %638 = vmatprep.subr.mxu0 0.0
  %639 = vmatpush1.msra.mxu0 0.0
  %640 = vmatprep.subr.mxu0 0.0
  %641 = vmatpush1.msra.mxu0 0.0
  %642 = vmatprep.subr.mxu0 0.0
  %643 = vmatpush1.msra.mxu0 0.0
  %644 = vmatprep.subr.mxu0 0.0
  %645 = vmatpush1.msra.mxu0 0.0
  %646 = vmatprep.subr.mxu0 0.0
  %647 = vmatpush1.msra.mxu0 0.0
  %648 = vmatprep.subr.mxu0 0.0
  %649 = vmatpush1.msra.mxu0 0.0
  %650 = vmatprep.subr.mxu0 0.0
  %651 = vmatpush1.msra.mxu0 0.0
  %652 = vmatprep.subr.mxu0 0.0
  %653 = vmatpush1.msra.mxu0 0.0
  %654 = vmatprep.subr.mxu0 0.0
  %655 = vmatpush1.msra.mxu0 0.0
  %656 = vmatprep.subr.mxu0 0.0
  %657 = vmatpush1.msra.mxu0 0.0
  %658 = vmatprep.subr.mxu0 0.0
  %659 = vmatpush1.msra.mxu0 0.0
  %660 = vmatprep.subr.mxu0 0.0
  %661 = vmatpush1.msra.mxu0 0.0
  %662 = vmatprep.subr.mxu0 0.0
  %663 = vmatpush1.msra.mxu0 0.0
  %664 = vmatprep.subr.mxu0 0.0
  %665 = vmatpush1.msra.mxu0 0.0
  %666 = vmatprep.mubr.f32.mxu0 0.0
  %667 = vmatmul.mubr.f32.gmra.mrb[0].mxu0 %v600
  %v668 = vpop.f32.mrb[0].mxu0
  %v669 = vadd.f32 0.0, %v668
  %v670 = vpop.f32.mrb[0].mxu0
  %671 = vdwg.mxu0
  %v672 = vadd.f32 %v167, %v669
  %v673 = vxor.u32 %v672, 2147483648
  %v674 = vmul.f32 %v673, 1.442695
  %v675 = vpow.pop %v674
  %v676 = vadd.f32 %v675, 1.0
  %v677 = vrcp.pop %v676
  %v678 = vmul.f32 1.0, %v677
  %v679 = vtanh.pop %v672
  %v680 = vmul.f32 %v678, %v487
  %682 = vrot.lane.b32.xlu0 %v679, 32
  %v683 = vpop.permute.xlu0 %682
  %v685 = vmul.f32 %v678, %v683
  %687 = vrot.lane.b32.xlu0 %v685, 32
  %v688 = vpop.permute.xlu0 %687
  %v690 = vadd.f32 %v680, %v688
  %v691 = vtanh.pop %v690
  %693 = vrot.lane.b32.xlu0 %v691, 32
  %v694 = vpop.permute.xlu0 %693
  %v696 = vmul.f32 %v678, %v694
  %698 = vrot.lane.b32.xlu0 %v696, 64
  %v699 = vpop.permute.xlu0 %698
  %702 = vrot.lane.b32.xlu0 %v599, 96
  %v703 = vpop.permute.xlu0 %702
  %v705 = vsel %vm195, %v699, %v703
  %v707 = vsel %vm299, %v705, 0
  %709 = vmatprep.subr.mxu0 0.0
  %710 = vmatpush1.msra.mxu0 %v33
  %711 = vmatprep.subr.mxu0 0.0
  %712 = vmatpush1.msra.mxu0 %v34
  %713 = vmatprep.subr.mxu0 0.0
  %714 = vmatpush1.msra.mxu0 %v35
  %715 = vmatprep.subr.mxu0 0.0
  %716 = vmatpush1.msra.mxu0 %v36
  %717 = vmatprep.subr.mxu0 0.0
  %718 = vmatpush1.msra.mxu0 %v37
  %719 = vmatprep.subr.mxu0 0.0
  %720 = vmatpush1.msra.mxu0 %v38
  %721 = vmatprep.subr.mxu0 0.0
  %722 = vmatpush1.msra.mxu0 %v39
  %723 = vmatprep.subr.mxu0 0.0
  %724 = vmatpush1.msra.mxu0 %v40
  %725 = vmatprep.subr.mxu0 0.0
  %726 = vmatpush1.msra.mxu0 0.0
  %727 = vmatprep.subr.mxu0 0.0
  %728 = vmatpush1.msra.mxu0 0.0
  %729 = vmatprep.subr.mxu0 0.0
  %730 = vmatpush1.msra.mxu0 0.0
  %731 = vmatprep.subr.mxu0 0.0
  %732 = vmatpush1.msra.mxu0 0.0
  %733 = vmatprep.subr.mxu0 0.0
  %734 = vmatpush1.msra.mxu0 0.0
  %735 = vmatprep.subr.mxu0 0.0
  %736 = vmatpush1.msra.mxu0 0.0
  %737 = vmatprep.subr.mxu0 0.0
  %738 = vmatpush1.msra.mxu0 0.0
  %739 = vmatprep.subr.mxu0 0.0
  %740 = vmatpush1.msra.mxu0 0.0
  %741 = vmatprep.subr.mxu0 0.0
  %742 = vmatpush1.msra.mxu0 0.0
  %743 = vmatprep.subr.mxu0 0.0
  %744 = vmatpush1.msra.mxu0 0.0
  %745 = vmatprep.subr.mxu0 0.0
  %746 = vmatpush1.msra.mxu0 0.0
  %747 = vmatprep.subr.mxu0 0.0
  %748 = vmatpush1.msra.mxu0 0.0
  %749 = vmatprep.subr.mxu0 0.0
  %750 = vmatpush1.msra.mxu0 0.0
  %751 = vmatprep.subr.mxu0 0.0
  %752 = vmatpush1.msra.mxu0 0.0
  %753 = vmatprep.subr.mxu0 0.0
  %754 = vmatpush1.msra.mxu0 0.0
  %755 = vmatprep.subr.mxu0 0.0
  %756 = vmatpush1.msra.mxu0 0.0
  %757 = vmatprep.subr.mxu0 0.0
  %758 = vmatpush1.msra.mxu0 0.0
  %759 = vmatprep.subr.mxu0 0.0
  %760 = vmatpush1.msra.mxu0 0.0
  %761 = vmatprep.subr.mxu0 0.0
  %762 = vmatpush1.msra.mxu0 0.0
  %763 = vmatprep.subr.mxu0 0.0
  %764 = vmatpush1.msra.mxu0 0.0
  %765 = vmatprep.subr.mxu0 0.0
  %766 = vmatpush1.msra.mxu0 0.0
  %767 = vmatprep.subr.mxu0 0.0
  %768 = vmatpush1.msra.mxu0 0.0
  %769 = vmatprep.subr.mxu0 0.0
  %770 = vmatpush1.msra.mxu0 0.0
  %771 = vmatprep.subr.mxu0 0.0
  %772 = vmatpush1.msra.mxu0 0.0
  %773 = vmatprep.mubr.f32.mxu0 0.0
  %774 = vmatmul.mubr.f32.gmra.mrb[0].mxu0 %v707
  %v775 = vpop.f32.mrb[0].mxu0
  %v776 = vadd.f32 %v46, %v775
  %v777 = vpop.f32.mrb[0].mxu0
  %778 = vdwg.mxu0
  %v779 = vxor.u32 %v776, 2147483648
  %v780 = vmul.f32 %v779, 1.442695
  %v781 = vpow.pop %v780
  %v782 = vadd.f32 %v781, 1.0
  %v783 = vrcp.pop %v782
  %v784 = vmul.f32 1.0, %v783
  %v785 = vtanh.pop %v776
  %v786 = vmul.f32 %v784, %v593
  %788 = vrot.lane.b32.xlu0 %v785, 32
  %v789 = vpop.permute.xlu0 %788
  %v791 = vmul.f32 %v784, %v789
  %793 = vrot.lane.b32.xlu0 %v791, 32
  %v794 = vpop.permute.xlu0 %793
  %v796 = vadd.f32 %v786, %v794
  %v797 = vtanh.pop %v796
  %799 = vrot.lane.b32.xlu0 %v797, 32
  %v800 = vpop.permute.xlu0 %799
  %v802 = vmul.f32 %v784, %v800
  %v803 = vsel %vm195, %v699, 0
  %805 = vmatprep.subr.mxu0 0.0
  %806 = vmatpush1.msra.mxu0 %v29
  %807 = vmatprep.subr.mxu0 0.0
  %808 = vmatpush1.msra.mxu0 %v30
  %809 = vmatprep.subr.mxu0 0.0
  %810 = vmatpush1.msra.mxu0 %v31
  %811 = vmatprep.subr.mxu0 0.0
  %812 = vmatpush1.msra.mxu0 %v32
  %813 = vmatprep.subr.mxu0 0.0
  %814 = vmatpush1.msra.mxu0 0.0
  %815 = vmatprep.subr.mxu0 0.0
  %816 = vmatpush1.msra.mxu0 0.0
  %817 = vmatprep.subr.mxu0 0.0
  %818 = vmatpush1.msra.mxu0 0.0
  %819 = vmatprep.subr.mxu0 0.0
  %820 = vmatpush1.msra.mxu0 0.0
  %821 = vmatprep.subr.mxu0 0.0
  %822 = vmatpush1.msra.mxu0 0.0
  %823 = vmatprep.subr.mxu0 0.0
  %824 = vmatpush1.msra.mxu0 0.0
  %825 = vmatprep.subr.mxu0 0.0
  %826 = vmatpush1.msra.mxu0 0.0
  %827 = vmatprep.subr.mxu0 0.0
  %828 = vmatpush1.msra.mxu0 0.0
  %829 = vmatprep.subr.mxu0 0.0
  %830 = vmatpush1.msra.mxu0 0.0
  %831 = vmatprep.subr.mxu0 0.0
  %832 = vmatpush1.msra.mxu0 0.0
  %833 = vmatprep.subr.mxu0 0.0
  %834 = vmatpush1.msra.mxu0 0.0
  %835 = vmatprep.subr.mxu0 0.0
  %836 = vmatpush1.msra.mxu0 0.0
  %837 = vmatprep.subr.mxu0 0.0
  %838 = vmatpush1.msra.mxu0 0.0
  %839 = vmatprep.subr.mxu0 0.0
  %840 = vmatpush1.msra.mxu0 0.0
  %841 = vmatprep.subr.mxu0 0.0
  %842 = vmatpush1.msra.mxu0 0.0
  %843 = vmatprep.subr.mxu0 0.0
  %844 = vmatpush1.msra.mxu0 0.0
  %845 = vmatprep.subr.mxu0 0.0
  %846 = vmatpush1.msra.mxu0 0.0
  %847 = vmatprep.subr.mxu0 0.0
  %848 = vmatpush1.msra.mxu0 0.0
  %849 = vmatprep.subr.mxu0 0.0
  %850 = vmatpush1.msra.mxu0 0.0
  %851 = vmatprep.subr.mxu0 0.0
  %852 = vmatpush1.msra.mxu0 0.0
  %853 = vmatprep.subr.mxu0 0.0
  %854 = vmatpush1.msra.mxu0 0.0
  %855 = vmatprep.subr.mxu0 0.0
  %856 = vmatpush1.msra.mxu0 0.0
  %857 = vmatprep.subr.mxu0 0.0
  %858 = vmatpush1.msra.mxu0 0.0
  %859 = vmatprep.subr.mxu0 0.0
  %860 = vmatpush1.msra.mxu0 0.0
  %861 = vmatprep.subr.mxu0 0.0
  %862 = vmatpush1.msra.mxu0 0.0
  %863 = vmatprep.subr.mxu0 0.0
  %864 = vmatpush1.msra.mxu0 0.0
  %865 = vmatprep.subr.mxu0 0.0
  %866 = vmatpush1.msra.mxu0 0.0
  %867 = vmatprep.subr.mxu0 0.0
  %868 = vmatpush1.msra.mxu0 0.0
  %869 = vmatprep.mubr.f32.mxu0 0.0
  %870 = vmatmul.mubr.f32.gmra.mrb[0].mxu0 %v803
  %v871 = vpop.f32.mrb[0].mxu0
  %v872 = vadd.f32 0.0, %v871
  %v873 = vpop.f32.mrb[0].mxu0
  %874 = vdwg.mxu0
  %v875 = vadd.f32 %v172, %v872
  %v876 = vxor.u32 %v875, 2147483648
  %v877 = vmul.f32 %v876, 1.442695
  %v878 = vpow.pop %v877
  %v879 = vadd.f32 %v878, 1.0
  %v880 = vrcp.pop %v879
  %v881 = vmul.f32 1.0, %v880
  %v882 = vtanh.pop %v875
  %v883 = vmul.f32 %v881, %v690
  %885 = vrot.lane.b32.xlu0 %v882, 32
  %v886 = vpop.permute.xlu0 %885
  %v888 = vmul.f32 %v881, %v886
  %890 = vrot.lane.b32.xlu0 %v888, 32
  %v891 = vpop.permute.xlu0 %890
  %v893 = vadd.f32 %v883, %v891
  %v894 = vtanh.pop %v893
  %896 = vrot.lane.b32.xlu0 %v894, 32
  %v897 = vpop.permute.xlu0 %896
  %v899 = vmul.f32 %v881, %v897
  %901 = vrot.lane.b32.xlu0 %v899, 64
  %v902 = vpop.permute.xlu0 %901
  %905 = vrot.lane.b32.xlu0 %v802, 96
  %v906 = vpop.permute.xlu0 %905
  %v908 = vsel %vm195, %v902, %v906
  %v910 = vsel %vm299, %v908, 0
  %912 = vmatprep.subr.mxu0 0.0
  %913 = vmatpush1.msra.mxu0 %v33
  %914 = vmatprep.subr.mxu0 0.0
  %915 = vmatpush1.msra.mxu0 %v34
  %916 = vmatprep.subr.mxu0 0.0
  %917 = vmatpush1.msra.mxu0 %v35
  %918 = vmatprep.subr.mxu0 0.0
  %919 = vmatpush1.msra.mxu0 %v36
  %920 = vmatprep.subr.mxu0 0.0
  %921 = vmatpush1.msra.mxu0 %v37
  %922 = vmatprep.subr.mxu0 0.0
  %923 = vmatpush1.msra.mxu0 %v38
  %924 = vmatprep.subr.mxu0 0.0
  %925 = vmatpush1.msra.mxu0 %v39
  %926 = vmatprep.subr.mxu0 0.0
  %927 = vmatpush1.msra.mxu0 %v40
  %928 = vmatprep.subr.mxu0 0.0
  %929 = vmatpush1.msra.mxu0 0.0
  %930 = vmatprep.subr.mxu0 0.0
  %931 = vmatpush1.msra.mxu0 0.0
  %932 = vmatprep.subr.mxu0 0.0
  %933 = vmatpush1.msra.mxu0 0.0
  %934 = vmatprep.subr.mxu0 0.0
  %935 = vmatpush1.msra.mxu0 0.0
  %936 = vmatprep.subr.mxu0 0.0
  %937 = vmatpush1.msra.mxu0 0.0
  %938 = vmatprep.subr.mxu0 0.0
  %939 = vmatpush1.msra.mxu0 0.0
  %940 = vmatprep.subr.mxu0 0.0
  %941 = vmatpush1.msra.mxu0 0.0
  %942 = vmatprep.subr.mxu0 0.0
  %943 = vmatpush1.msra.mxu0 0.0
  %944 = vmatprep.subr.mxu0 0.0
  %945 = vmatpush1.msra.mxu0 0.0
  %946 = vmatprep.subr.mxu0 0.0
  %947 = vmatpush1.msra.mxu0 0.0
  %948 = vmatprep.subr.mxu0 0.0
  %949 = vmatpush1.msra.mxu0 0.0
  %950 = vmatprep.subr.mxu0 0.0
  %951 = vmatpush1.msra.mxu0 0.0
  %952 = vmatprep.subr.mxu0 0.0
  %953 = vmatpush1.msra.mxu0 0.0
  %954 = vmatprep.subr.mxu0 0.0
  %955 = vmatpush1.msra.mxu0 0.0
  %956 = vmatprep.subr.mxu0 0.0
  %957 = vmatpush1.msra.mxu0 0.0
  %958 = vmatprep.subr.mxu0 0.0
  %959 = vmatpush1.msra.mxu0 0.0
  %960 = vmatprep.subr.mxu0 0.0
  %961 = vmatpush1.msra.mxu0 0.0
  %962 = vmatprep.subr.mxu0 0.0
  %963 = vmatpush1.msra.mxu0 0.0
  %964 = vmatprep.subr.mxu0 0.0
  %965 = vmatpush1.msra.mxu0 0.0
  %966 = vmatprep.subr.mxu0 0.0
  %967 = vmatpush1.msra.mxu0 0.0
  %968 = vmatprep.subr.mxu0 0.0
  %969 = vmatpush1.msra.mxu0 0.0
  %970 = vmatprep.subr.mxu0 0.0
  %971 = vmatpush1.msra.mxu0 0.0
  %972 = vmatprep.subr.mxu0 0.0
  %973 = vmatpush1.msra.mxu0 0.0
  %974 = vmatprep.subr.mxu0 0.0
  %975 = vmatpush1.msra.mxu0 0.0
  %976 = vmatprep.mubr.f32.mxu0 0.0
  %977 = vmatmul.mubr.f32.gmra.mrb[0].mxu0 %v910
  %v978 = vpop.f32.mrb[0].mxu0
  %v979 = vadd.f32 %v46, %v978
  %v980 = vpop.f32.mrb[0].mxu0
  %981 = vdwg.mxu0
  %v982 = vxor.u32 %v979, 2147483648
  %v983 = vmul.f32 %v982, 1.442695
  %v984 = vpow.pop %v983
  %v985 = vadd.f32 %v984, 1.0
  %v986 = vrcp.pop %v985
  %v987 = vmul.f32 1.0, %v986
  %v988 = vtanh.pop %v979
  %v989 = vmul.f32 %v987, %v796
  %991 = vrot.lane.b32.xlu0 %v988, 32
  %v992 = vpop.permute.xlu0 %991
  %v994 = vmul.f32 %v987, %v992
  %996 = vrot.lane.b32.xlu0 %v994, 32
  %v997 = vpop.permute.xlu0 %996
  %v999 = vadd.f32 %v989, %v997
  %v1000 = vtanh.pop %v999
  %1002 = vrot.lane.b32.xlu0 %v1000, 32
  %v1003 = vpop.permute.xlu0 %1002
  %v1005 = vmul.f32 %v987, %v1003
  %v1006 = vsel %vm195, %v902, 0
  %1008 = vmatprep.subr.mxu0 0.0
  %1009 = vmatpush1.msra.mxu0 %v29
  %1010 = vmatprep.subr.mxu0 0.0
  %1011 = vmatpush1.msra.mxu0 %v30
  %1012 = vmatprep.subr.mxu0 0.0
  %1013 = vmatpush1.msra.mxu0 %v31
  %1014 = vmatprep.subr.mxu0 0.0
  %1015 = vmatpush1.msra.mxu0 %v32
  %1016 = vmatprep.subr.mxu0 0.0
  %1017 = vmatpush1.msra.mxu0 0.0
  %1018 = vmatprep.subr.mxu0 0.0
  %1019 = vmatpush1.msra.mxu0 0.0
  %1020 = vmatprep.subr.mxu0 0.0
  %1021 = vmatpush1.msra.mxu0 0.0
  %1022 = vmatprep.subr.mxu0 0.0
  %1023 = vmatpush1.msra.mxu0 0.0
  %1024 = vmatprep.subr.mxu0 0.0
  %1025 = vmatpush1.msra.mxu0 0.0
  %1026 = vmatprep.subr.mxu0 0.0
  %1027 = vmatpush1.msra.mxu0 0.0
  %1028 = vmatprep.subr.mxu0 0.0
  %1029 = vmatpush1.msra.mxu0 0.0
  %1030 = vmatprep.subr.mxu0 0.0
  %1031 = vmatpush1.msra.mxu0 0.0
  %1032 = vmatprep.subr.mxu0 0.0
  %1033 = vmatpush1.msra.mxu0 0.0
  %1034 = vmatprep.subr.mxu0 0.0
  %1035 = vmatpush1.msra.mxu0 0.0
  %1036 = vmatprep.subr.mxu0 0.0
  %1037 = vmatpush1.msra.mxu0 0.0
  %1038 = vmatprep.subr.mxu0 0.0
  %1039 = vmatpush1.msra.mxu0 0.0
  %1040 = vmatprep.subr.mxu0 0.0
  %1041 = vmatpush1.msra.mxu0 0.0
  %1042 = vmatprep.subr.mxu0 0.0
  %1043 = vmatpush1.msra.mxu0 0.0
  %1044 = vmatprep.subr.mxu0 0.0
  %1045 = vmatpush1.msra.mxu0 0.0
  %1046 = vmatprep.subr.mxu0 0.0
  %1047 = vmatpush1.msra.mxu0 0.0
  %1048 = vmatprep.subr.mxu0 0.0
  %1049 = vmatpush1.msra.mxu0 0.0
  %1050 = vmatprep.subr.mxu0 0.0
  %1051 = vmatpush1.msra.mxu0 0.0
  %1052 = vmatprep.subr.mxu0 0.0
  %1053 = vmatpush1.msra.mxu0 0.0
  %1054 = vmatprep.subr.mxu0 0.0
  %1055 = vmatpush1.msra.mxu0 0.0
  %1056 = vmatprep.subr.mxu0 0.0
  %1057 = vmatpush1.msra.mxu0 0.0
  %1058 = vmatprep.subr.mxu0 0.0
  %1059 = vmatpush1.msra.mxu0 0.0
  %1060 = vmatprep.subr.mxu0 0.0
  %1061 = vmatpush1.msra.mxu0 0.0
  %1062 = vmatprep.subr.mxu0 0.0
  %1063 = vmatpush1.msra.mxu0 0.0
  %1064 = vmatprep.subr.mxu0 0.0
  %1065 = vmatpush1.msra.mxu0 0.0
  %1066 = vmatprep.subr.mxu0 0.0
  %1067 = vmatpush1.msra.mxu0 0.0
  %1068 = vmatprep.subr.mxu0 0.0
  %1069 = vmatpush1.msra.mxu0 0.0
  %1070 = vmatprep.subr.mxu0 0.0
  %1071 = vmatpush1.msra.mxu0 0.0
  %1072 = vmatprep.mubr.f32.mxu0 0.0
  %1073 = vmatmul.mubr.f32.gmra.mrb[0].mxu0 %v1006
  %v1074 = vpop.f32.mrb[0].mxu0
  %v1075 = vadd.f32 0.0, %v1074
  %v1076 = vpop.f32.mrb[0].mxu0
  %1077 = vdwg.mxu0
  %v1078 = vadd.f32 %v177, %v1075
  %v1079 = vxor.u32 %v1078, 2147483648
  %v1080 = vmul.f32 %v1079, 1.442695
  %v1081 = vpow.pop %v1080
  %v1082 = vadd.f32 %v1081, 1.0
  %v1083 = vrcp.pop %v1082
  %v1084 = vmul.f32 1.0, %v1083
  %v1085 = vtanh.pop %v1078
  %v1086 = vmul.f32 %v1084, %v893
  %1088 = vrot.lane.b32.xlu0 %v1085, 32
  %v1089 = vpop.permute.xlu0 %1088
  %v1091 = vmul.f32 %v1084, %v1089
  %1093 = vrot.lane.b32.xlu0 %v1091, 32
  %v1094 = vpop.permute.xlu0 %1093
  %v1096 = vadd.f32 %v1086, %v1094
  %v1097 = vtanh.pop %v1096
  %1099 = vrot.lane.b32.xlu0 %v1097, 32
  %v1100 = vpop.permute.xlu0 %1099
  %v1102 = vmul.f32 %v1084, %v1100
  %1104 = vrot.lane.b32.xlu0 %v1102, 64
  %v1105 = vpop.permute.xlu0 %1104
  %1108 = vrot.lane.b32.xlu0 %v1005, 96
  %v1109 = vpop.permute.xlu0 %1108
  %v1111 = vsel %vm195, %v1105, %v1109
  %v1113 = vsel %vm299, %v1111, 0
  %1115 = vmatprep.subr.mxu0 0.0
  %1116 = vmatpush1.msra.mxu0 %v33
  %1117 = vmatprep.subr.mxu0 0.0
  %1118 = vmatpush1.msra.mxu0 %v34
  %1119 = vmatprep.subr.mxu0 0.0
  %1120 = vmatpush1.msra.mxu0 %v35
  %1121 = vmatprep.subr.mxu0 0.0
  %1122 = vmatpush1.msra.mxu0 %v36
  %1123 = vmatprep.subr.mxu0 0.0
  %1124 = vmatpush1.msra.mxu0 %v37
  %1125 = vmatprep.subr.mxu0 0.0
  %1126 = vmatpush1.msra.mxu0 %v38
  %1127 = vmatprep.subr.mxu0 0.0
  %1128 = vmatpush1.msra.mxu0 %v39
  %1129 = vmatprep.subr.mxu0 0.0
  %1130 = vmatpush1.msra.mxu0 %v40
  %1131 = vmatprep.subr.mxu0 0.0
  %1132 = vmatpush1.msra.mxu0 0.0
  %1133 = vmatprep.subr.mxu0 0.0
  %1134 = vmatpush1.msra.mxu0 0.0
  %1135 = vmatprep.subr.mxu0 0.0
  %1136 = vmatpush1.msra.mxu0 0.0
  %1137 = vmatprep.subr.mxu0 0.0
  %1138 = vmatpush1.msra.mxu0 0.0
  %1139 = vmatprep.subr.mxu0 0.0
  %1140 = vmatpush1.msra.mxu0 0.0
  %1141 = vmatprep.subr.mxu0 0.0
  %1142 = vmatpush1.msra.mxu0 0.0
  %1143 = vmatprep.subr.mxu0 0.0
  %1144 = vmatpush1.msra.mxu0 0.0
  %1145 = vmatprep.subr.mxu0 0.0
  %1146 = vmatpush1.msra.mxu0 0.0
  %1147 = vmatprep.subr.mxu0 0.0
  %1148 = vmatpush1.msra.mxu0 0.0
  %1149 = vmatprep.subr.mxu0 0.0
  %1150 = vmatpush1.msra.mxu0 0.0
  %1151 = vmatprep.subr.mxu0 0.0
  %1152 = vmatpush1.msra.mxu0 0.0
  %1153 = vmatprep.subr.mxu0 0.0
  %1154 = vmatpush1.msra.mxu0 0.0
  %1155 = vmatprep.subr.mxu0 0.0
  %1156 = vmatpush1.msra.mxu0 0.0
  %1157 = vmatprep.subr.mxu0 0.0
  %1158 = vmatpush1.msra.mxu0 0.0
  %1159 = vmatprep.subr.mxu0 0.0
  %1160 = vmatpush1.msra.mxu0 0.0
  %1161 = vmatprep.subr.mxu0 0.0
  %1162 = vmatpush1.msra.mxu0 0.0
  %1163 = vmatprep.subr.mxu0 0.0
  %1164 = vmatpush1.msra.mxu0 0.0
  %1165 = vmatprep.subr.mxu0 0.0
  %1166 = vmatpush1.msra.mxu0 0.0
  %1167 = vmatprep.subr.mxu0 0.0
  %1168 = vmatpush1.msra.mxu0 0.0
  %1169 = vmatprep.subr.mxu0 0.0
  %1170 = vmatpush1.msra.mxu0 0.0
  %1171 = vmatprep.subr.mxu0 0.0
  %1172 = vmatpush1.msra.mxu0 0.0
  %1173 = vmatprep.subr.mxu0 0.0
  %1174 = vmatpush1.msra.mxu0 0.0
  %1175 = vmatprep.subr.mxu0 0.0
  %1176 = vmatpush1.msra.mxu0 0.0
  %1177 = vmatprep.subr.mxu0 0.0
  %1178 = vmatpush1.msra.mxu0 0.0
  %1179 = vmatprep.mubr.f32.mxu0 0.0
  %1180 = vmatmul.mubr.f32.gmra.mrb[0].mxu0 %v1113
  %v1181 = vpop.f32.mrb[0].mxu0
  %v1182 = vadd.f32 %v46, %v1181
  %v1183 = vpop.f32.mrb[0].mxu0
  %1184 = vdwg.mxu0
  %v1185 = vxor.u32 %v1182, 2147483648
  %v1186 = vmul.f32 %v1185, 1.442695
  %v1187 = vpow.pop %v1186
  %v1188 = vadd.f32 %v1187, 1.0
  %v1189 = vrcp.pop %v1188
  %v1190 = vmul.f32 1.0, %v1189
  %v1191 = vtanh.pop %v1182
  %v1192 = vmul.f32 %v1190, %v999
  %1194 = vrot.lane.b32.xlu0 %v1191, 32
  %v1195 = vpop.permute.xlu0 %1194
  %v1197 = vmul.f32 %v1190, %v1195
  %1199 = vrot.lane.b32.xlu0 %v1197, 32
  %v1200 = vpop.permute.xlu0 %1199
  %v1202 = vadd.f32 %v1192, %v1200
  %v1203 = vtanh.pop %v1202
  %1205 = vrot.lane.b32.xlu0 %v1203, 32
  %v1206 = vpop.permute.xlu0 %1205
  %v1208 = vmul.f32 %v1190, %v1206
  %v1209 = vsel %vm195, %v1105, 0
  %1211 = vmatprep.subr.mxu0 0.0
  %1212 = vmatpush1.msra.mxu0 %v29
  %1213 = vmatprep.subr.mxu0 0.0
  %1214 = vmatpush1.msra.mxu0 %v30
  %1215 = vmatprep.subr.mxu0 0.0
  %1216 = vmatpush1.msra.mxu0 %v31
  %1217 = vmatprep.subr.mxu0 0.0
  %1218 = vmatpush1.msra.mxu0 %v32
  %1219 = vmatprep.subr.mxu0 0.0
  %1220 = vmatpush1.msra.mxu0 0.0
  %1221 = vmatprep.subr.mxu0 0.0
  %1222 = vmatpush1.msra.mxu0 0.0
  %1223 = vmatprep.subr.mxu0 0.0
  %1224 = vmatpush1.msra.mxu0 0.0
  %1225 = vmatprep.subr.mxu0 0.0
  %1226 = vmatpush1.msra.mxu0 0.0
  %1227 = vmatprep.subr.mxu0 0.0
  %1228 = vmatpush1.msra.mxu0 0.0
  %1229 = vmatprep.subr.mxu0 0.0
  %1230 = vmatpush1.msra.mxu0 0.0
  %1231 = vmatprep.subr.mxu0 0.0
  %1232 = vmatpush1.msra.mxu0 0.0
  %1233 = vmatprep.subr.mxu0 0.0
  %1234 = vmatpush1.msra.mxu0 0.0
  %1235 = vmatprep.subr.mxu0 0.0
  %1236 = vmatpush1.msra.mxu0 0.0
  %1237 = vmatprep.subr.mxu0 0.0
  %1238 = vmatpush1.msra.mxu0 0.0
  %1239 = vmatprep.subr.mxu0 0.0
  %1240 = vmatpush1.msra.mxu0 0.0
  %1241 = vmatprep.subr.mxu0 0.0
  %1242 = vmatpush1.msra.mxu0 0.0
  %1243 = vmatprep.subr.mxu0 0.0
  %1244 = vmatpush1.msra.mxu0 0.0
  %1245 = vmatprep.subr.mxu0 0.0
  %1246 = vmatpush1.msra.mxu0 0.0
  %1247 = vmatprep.subr.mxu0 0.0
  %1248 = vmatpush1.msra.mxu0 0.0
  %1249 = vmatprep.subr.mxu0 0.0
  %1250 = vmatpush1.msra.mxu0 0.0
  %1251 = vmatprep.subr.mxu0 0.0
  %1252 = vmatpush1.msra.mxu0 0.0
  %1253 = vmatprep.subr.mxu0 0.0
  %1254 = vmatpush1.msra.mxu0 0.0
  %1255 = vmatprep.subr.mxu0 0.0
  %1256 = vmatpush1.msra.mxu0 0.0
  %1257 = vmatprep.subr.mxu0 0.0
  %1258 = vmatpush1.msra.mxu0 0.0
  %1259 = vmatprep.subr.mxu0 0.0
  %1260 = vmatpush1.msra.mxu0 0.0
  %1261 = vmatprep.subr.mxu0 0.0
  %1262 = vmatpush1.msra.mxu0 0.0
  %1263 = vmatprep.subr.mxu0 0.0
  %1264 = vmatpush1.msra.mxu0 0.0
  %1265 = vmatprep.subr.mxu0 0.0
  %1266 = vmatpush1.msra.mxu0 0.0
  %1267 = vmatprep.subr.mxu0 0.0
  %1268 = vmatpush1.msra.mxu0 0.0
  %1269 = vmatprep.subr.mxu0 0.0
  %1270 = vmatpush1.msra.mxu0 0.0
  %1271 = vmatprep.subr.mxu0 0.0
  %1272 = vmatpush1.msra.mxu0 0.0
  %1273 = vmatprep.subr.mxu0 0.0
  %1274 = vmatpush1.msra.mxu0 0.0
  %1275 = vmatprep.mubr.f32.mxu0 0.0
  %1276 = vmatmul.mubr.f32.gmra.mrb[0].mxu0 %v1209
  %v1277 = vpop.f32.mrb[0].mxu0
  %v1278 = vadd.f32 0.0, %v1277
  %v1279 = vpop.f32.mrb[0].mxu0
  %1280 = vdwg.mxu0
  %v1281 = vadd.f32 %v182, %v1278
  %v1282 = vxor.u32 %v1281, 2147483648
  %v1283 = vmul.f32 %v1282, 1.442695
  %v1284 = vpow.pop %v1283
  %v1285 = vadd.f32 %v1284, 1.0
  %v1286 = vrcp.pop %v1285
  %v1287 = vmul.f32 1.0, %v1286
  %v1288 = vtanh.pop %v1281
  %v1289 = vmul.f32 %v1287, %v1096
  %1291 = vrot.lane.b32.xlu0 %v1288, 32
  %v1292 = vpop.permute.xlu0 %1291
  %v1294 = vmul.f32 %v1287, %v1292
  %1296 = vrot.lane.b32.xlu0 %v1294, 32
  %v1297 = vpop.permute.xlu0 %1296
  %v1299 = vadd.f32 %v1289, %v1297
  %v1300 = vtanh.pop %v1299
  %1302 = vrot.lane.b32.xlu0 %v1300, 32
  %v1303 = vpop.permute.xlu0 %1302
  %v1305 = vmul.f32 %v1287, %v1303
  %1307 = vrot.lane.b32.xlu0 %v1305, 64
  %v1308 = vpop.permute.xlu0 %1307
  %1311 = vrot.lane.b32.xlu0 %v1208, 96
  %v1312 = vpop.permute.xlu0 %1311
  %v1314 = vsel %vm195, %v1308, %v1312
  %v1316 = vsel %vm299, %v1314, 0
  %1318 = vmatprep.subr.mxu0 0.0
  %1319 = vmatpush1.msra.mxu0 %v33
  %1320 = vmatprep.subr.mxu0 0.0
  %1321 = vmatpush1.msra.mxu0 %v34
  %1322 = vmatprep.subr.mxu0 0.0
  %1323 = vmatpush1.msra.mxu0 %v35
  %1324 = vmatprep.subr.mxu0 0.0
  %1325 = vmatpush1.msra.mxu0 %v36
  %1326 = vmatprep.subr.mxu0 0.0
  %1327 = vmatpush1.msra.mxu0 %v37
  %1328 = vmatprep.subr.mxu0 0.0
  %1329 = vmatpush1.msra.mxu0 %v38
  %1330 = vmatprep.subr.mxu0 0.0
  %1331 = vmatpush1.msra.mxu0 %v39
  %1332 = vmatprep.subr.mxu0 0.0
  %1333 = vmatpush1.msra.mxu0 %v40
  %1334 = vmatprep.subr.mxu0 0.0
  %1335 = vmatpush1.msra.mxu0 0.0
  %1336 = vmatprep.subr.mxu0 0.0
  %1337 = vmatpush1.msra.mxu0 0.0
  %1338 = vmatprep.subr.mxu0 0.0
  %1339 = vmatpush1.msra.mxu0 0.0
  %1340 = vmatprep.subr.mxu0 0.0
  %1341 = vmatpush1.msra.mxu0 0.0
  %1342 = vmatprep.subr.mxu0 0.0
  %1343 = vmatpush1.msra.mxu0 0.0
  %1344 = vmatprep.subr.mxu0 0.0
  %1345 = vmatpush1.msra.mxu0 0.0
  %1346 = vmatprep.subr.mxu0 0.0
  %1347 = vmatpush1.msra.mxu0 0.0
  %1348 = vmatprep.subr.mxu0 0.0
  %1349 = vmatpush1.msra.mxu0 0.0
  %1350 = vmatprep.subr.mxu0 0.0
  %1351 = vmatpush1.msra.mxu0 0.0
  %1352 = vmatprep.subr.mxu0 0.0
  %1353 = vmatpush1.msra.mxu0 0.0
  %1354 = vmatprep.subr.mxu0 0.0
  %1355 = vmatpush1.msra.mxu0 0.0
  %1356 = vmatprep.subr.mxu0 0.0
  %1357 = vmatpush1.msra.mxu0 0.0
  %1358 = vmatprep.subr.mxu0 0.0
  %1359 = vmatpush1.msra.mxu0 0.0
  %1360 = vmatprep.subr.mxu0 0.0
  %1361 = vmatpush1.msra.mxu0 0.0
  %1362 = vmatprep.subr.mxu0 0.0
  %1363 = vmatpush1.msra.mxu0 0.0
  %1364 = vmatprep.subr.mxu0 0.0
  %1365 = vmatpush1.msra.mxu0 0.0
  %1366 = vmatprep.subr.mxu0 0.0
  %1367 = vmatpush1.msra.mxu0 0.0
  %1368 = vmatprep.subr.mxu0 0.0
  %1369 = vmatpush1.msra.mxu0 0.0
  %1370 = vmatprep.subr.mxu0 0.0
  %1371 = vmatpush1.msra.mxu0 0.0
  %1372 = vmatprep.subr.mxu0 0.0
  %1373 = vmatpush1.msra.mxu0 0.0
  %1374 = vmatprep.subr.mxu0 0.0
  %1375 = vmatpush1.msra.mxu0 0.0
  %1376 = vmatprep.subr.mxu0 0.0
  %1377 = vmatpush1.msra.mxu0 0.0
  %1378 = vmatprep.subr.mxu0 0.0
  %1379 = vmatpush1.msra.mxu0 0.0
  %1380 = vmatprep.subr.mxu0 0.0
  %1381 = vmatpush1.msra.mxu0 0.0
  %1382 = vmatprep.mubr.f32.mxu0 0.0
  %1383 = vmatmul.mubr.f32.gmra.mrb[0].mxu0 %v1316
  %v1384 = vpop.f32.mrb[0].mxu0
  %v1385 = vadd.f32 %v46, %v1384
  %v1386 = vpop.f32.mrb[0].mxu0
  %1387 = vdwg.mxu0
  %v1388 = vxor.u32 %v1385, 2147483648
  %v1389 = vmul.f32 %v1388, 1.442695
  %v1390 = vpow.pop %v1389
  %v1391 = vadd.f32 %v1390, 1.0
  %v1392 = vrcp.pop %v1391
  %v1393 = vmul.f32 1.0, %v1392
  %v1394 = vtanh.pop %v1385
  %v1395 = vmul.f32 %v1393, %v1202
  %1397 = vrot.lane.b32.xlu0 %v1394, 32
  %v1398 = vpop.permute.xlu0 %1397
  %v1400 = vmul.f32 %v1393, %v1398
  %1402 = vrot.lane.b32.xlu0 %v1400, 32
  %v1403 = vpop.permute.xlu0 %1402
  %v1405 = vadd.f32 %v1395, %v1403
  %v1406 = vtanh.pop %v1405
  %1408 = vrot.lane.b32.xlu0 %v1406, 32
  %v1409 = vpop.permute.xlu0 %1408
  %v1411 = vmul.f32 %v1393, %v1409
  %v1412 = vsel %vm195, %v1308, 0
  %1414 = vmatprep.subr.mxu0 0.0
  %1415 = vmatpush1.msra.mxu0 %v29
  %1416 = vmatprep.subr.mxu0 0.0
  %1417 = vmatpush1.msra.mxu0 %v30
  %1418 = vmatprep.subr.mxu0 0.0
  %1419 = vmatpush1.msra.mxu0 %v31
  %1420 = vmatprep.subr.mxu0 0.0
  %1421 = vmatpush1.msra.mxu0 %v32
  %1422 = vmatprep.subr.mxu0 0.0
  %1423 = vmatpush1.msra.mxu0 0.0
  %1424 = vmatprep.subr.mxu0 0.0
  %1425 = vmatpush1.msra.mxu0 0.0
  %1426 = vmatprep.subr.mxu0 0.0
  %1427 = vmatpush1.msra.mxu0 0.0
  %1428 = vmatprep.subr.mxu0 0.0
  %1429 = vmatpush1.msra.mxu0 0.0
  %1430 = vmatprep.subr.mxu0 0.0
  %1431 = vmatpush1.msra.mxu0 0.0
  %1432 = vmatprep.subr.mxu0 0.0
  %1433 = vmatpush1.msra.mxu0 0.0
  %1434 = vmatprep.subr.mxu0 0.0
  %1435 = vmatpush1.msra.mxu0 0.0
  %1436 = vmatprep.subr.mxu0 0.0
  %1437 = vmatpush1.msra.mxu0 0.0
  %1438 = vmatprep.subr.mxu0 0.0
  %1439 = vmatpush1.msra.mxu0 0.0
  %1440 = vmatprep.subr.mxu0 0.0
  %1441 = vmatpush1.msra.mxu0 0.0
  %1442 = vmatprep.subr.mxu0 0.0
  %1443 = vmatpush1.msra.mxu0 0.0
  %1444 = vmatprep.subr.mxu0 0.0
  %1445 = vmatpush1.msra.mxu0 0.0
  %1446 = vmatprep.subr.mxu0 0.0
  %1447 = vmatpush1.msra.mxu0 0.0
  %1448 = vmatprep.subr.mxu0 0.0
  %1449 = vmatpush1.msra.mxu0 0.0
  %1450 = vmatprep.subr.mxu0 0.0
  %1451 = vmatpush1.msra.mxu0 0.0
  %1452 = vmatprep.subr.mxu0 0.0
  %1453 = vmatpush1.msra.mxu0 0.0
  %1454 = vmatprep.subr.mxu0 0.0
  %1455 = vmatpush1.msra.mxu0 0.0
  %1456 = vmatprep.subr.mxu0 0.0
  %1457 = vmatpush1.msra.mxu0 0.0
  %1458 = vmatprep.subr.mxu0 0.0
  %1459 = vmatpush1.msra.mxu0 0.0
  %1460 = vmatprep.subr.mxu0 0.0
  %1461 = vmatpush1.msra.mxu0 0.0
  %1462 = vmatprep.subr.mxu0 0.0
  %1463 = vmatpush1.msra.mxu0 0.0
  %1464 = vmatprep.subr.mxu0 0.0
  %1465 = vmatpush1.msra.mxu0 0.0
  %1466 = vmatprep.subr.mxu0 0.0
  %1467 = vmatpush1.msra.mxu0 0.0
  %1468 = vmatprep.subr.mxu0 0.0
  %1469 = vmatpush1.msra.mxu0 0.0
  %1470 = vmatprep.subr.mxu0 0.0
  %1471 = vmatpush1.msra.mxu0 0.0
  %1472 = vmatprep.subr.mxu0 0.0
  %1473 = vmatpush1.msra.mxu0 0.0
  %1474 = vmatprep.subr.mxu0 0.0
  %1475 = vmatpush1.msra.mxu0 0.0
  %1476 = vmatprep.subr.mxu0 0.0
  %1477 = vmatpush1.msra.mxu0 0.0
  %1478 = vmatprep.mubr.f32.mxu0 0.0
  %1479 = vmatmul.mubr.f32.gmra.mrb[0].mxu0 %v1412
  %v1480 = vpop.f32.mrb[0].mxu0
  %v1481 = vadd.f32 0.0, %v1480
  %v1482 = vpop.f32.mrb[0].mxu0
  %1483 = vdwg.mxu0
  %v1484 = vadd.f32 %v187, %v1481
  %v1485 = vxor.u32 %v1484, 2147483648
  %v1486 = vmul.f32 %v1485, 1.442695
  %v1487 = vpow.pop %v1486
  %v1488 = vadd.f32 %v1487, 1.0
  %v1489 = vrcp.pop %v1488
  %v1490 = vmul.f32 1.0, %v1489
  %v1491 = vtanh.pop %v1484
  %v1492 = vmul.f32 %v1490, %v1299
  %1494 = vrot.lane.b32.xlu0 %v1491, 32
  %v1495 = vpop.permute.xlu0 %1494
  %v1497 = vmul.f32 %v1490, %v1495
  %1499 = vrot.lane.b32.xlu0 %v1497, 32
  %v1500 = vpop.permute.xlu0 %1499
  %v1502 = vadd.f32 %v1492, %v1500
  %v1503 = vtanh.pop %v1502
  %1505 = vrot.lane.b32.xlu0 %v1503, 32
  %v1506 = vpop.permute.xlu0 %1505
  %v1508 = vmul.f32 %v1490, %v1506
  %1510 = vrot.lane.b32.xlu0 %v1508, 64
  %v1511 = vpop.permute.xlu0 %1510
  %1514 = vrot.lane.b32.xlu0 %v1411, 96
  %v1515 = vpop.permute.xlu0 %1514
  %v1517 = vsel %vm195, %v1511, %v1515
  %v1519 = vsel %vm299, %v1517, 0
  %1521 = vmatprep.subr.mxu0 0.0
  %1522 = vmatpush1.msra.mxu0 %v33
  %1523 = vmatprep.subr.mxu0 0.0
  %1524 = vmatpush1.msra.mxu0 %v34
  %1525 = vmatprep.subr.mxu0 0.0
  %1526 = vmatpush1.msra.mxu0 %v35
  %1527 = vmatprep.subr.mxu0 0.0
  %1528 = vmatpush1.msra.mxu0 %v36
  %1529 = vmatprep.subr.mxu0 0.0
  %1530 = vmatpush1.msra.mxu0 %v37
  %1531 = vmatprep.subr.mxu0 0.0
  %1532 = vmatpush1.msra.mxu0 %v38
  %1533 = vmatprep.subr.mxu0 0.0
  %1534 = vmatpush1.msra.mxu0 %v39
  %1535 = vmatprep.subr.mxu0 0.0
  %1536 = vmatpush1.msra.mxu0 %v40
  %1537 = vmatprep.subr.mxu0 0.0
  %1538 = vmatpush1.msra.mxu0 0.0
  %1539 = vmatprep.subr.mxu0 0.0
  %1540 = vmatpush1.msra.mxu0 0.0
  %1541 = vmatprep.subr.mxu0 0.0
  %1542 = vmatpush1.msra.mxu0 0.0
  %1543 = vmatprep.subr.mxu0 0.0
  %1544 = vmatpush1.msra.mxu0 0.0
  %1545 = vmatprep.subr.mxu0 0.0
  %1546 = vmatpush1.msra.mxu0 0.0
  %1547 = vmatprep.subr.mxu0 0.0
  %1548 = vmatpush1.msra.mxu0 0.0
  %1549 = vmatprep.subr.mxu0 0.0
  %1550 = vmatpush1.msra.mxu0 0.0
  %1551 = vmatprep.subr.mxu0 0.0
  %1552 = vmatpush1.msra.mxu0 0.0
  %1553 = vmatprep.subr.mxu0 0.0
  %1554 = vmatpush1.msra.mxu0 0.0
  %1555 = vmatprep.subr.mxu0 0.0
  %1556 = vmatpush1.msra.mxu0 0.0
  %1557 = vmatprep.subr.mxu0 0.0
  %1558 = vmatpush1.msra.mxu0 0.0
  %1559 = vmatprep.subr.mxu0 0.0
  %1560 = vmatpush1.msra.mxu0 0.0
  %1561 = vmatprep.subr.mxu0 0.0
  %1562 = vmatpush1.msra.mxu0 0.0
  %1563 = vmatprep.subr.mxu0 0.0
  %1564 = vmatpush1.msra.mxu0 0.0
  %1565 = vmatprep.subr.mxu0 0.0
  %1566 = vmatpush1.msra.mxu0 0.0
  %1567 = vmatprep.subr.mxu0 0.0
  %1568 = vmatpush1.msra.mxu0 0.0
  %1569 = vmatprep.subr.mxu0 0.0
  %1570 = vmatpush1.msra.mxu0 0.0
  %1571 = vmatprep.subr.mxu0 0.0
  %1572 = vmatpush1.msra.mxu0 0.0
  %1573 = vmatprep.subr.mxu0 0.0
  %1574 = vmatpush1.msra.mxu0 0.0
  %1575 = vmatprep.subr.mxu0 0.0
  %1576 = vmatpush1.msra.mxu0 0.0
  %1577 = vmatprep.subr.mxu0 0.0
  %1578 = vmatpush1.msra.mxu0 0.0
  %1579 = vmatprep.subr.mxu0 0.0
  %1580 = vmatpush1.msra.mxu0 0.0
  %1581 = vmatprep.subr.mxu0 0.0
  %1582 = vmatpush1.msra.mxu0 0.0
  %1583 = vmatprep.subr.mxu0 0.0
  %1584 = vmatpush1.msra.mxu0 0.0
  %1585 = vmatprep.mubr.f32.mxu0 0.0
  %1586 = vmatmul.mubr.f32.gmra.mrb[0].mxu0 %v1519
  %v1587 = vpop.f32.mrb[0].mxu0
  %v1588 = vadd.f32 %v46, %v1587
  %v1589 = vpop.f32.mrb[0].mxu0
  %1590 = vdwg.mxu0
  %v1591 = vxor.u32 %v1588, 2147483648
  %v1592 = vmul.f32 %v1591, 1.442695
  %v1593 = vpow.pop %v1592
  %v1594 = vadd.f32 %v1593, 1.0
  %v1595 = vrcp.pop %v1594
  %v1596 = vmul.f32 1.0, %v1595
  %v1597 = vtanh.pop %v1588
  %v1598 = vmul.f32 %v1596, %v1405
  %1600 = vrot.lane.b32.xlu0 %v1597, 32
  %v1601 = vpop.permute.xlu0 %1600
  %v1603 = vmul.f32 %v1596, %v1601
  %1605 = vrot.lane.b32.xlu0 %v1603, 32
  %v1606 = vpop.permute.xlu0 %1605
  %v1608 = vadd.f32 %v1598, %v1606
  %v1609 = vtanh.pop %v1608
  %1611 = vrot.lane.b32.xlu0 %v1609, 32
  %v1612 = vpop.permute.xlu0 %1611
  %v1614 = vmul.f32 %v1596, %v1612
  %v1615 = vsel %vm195, %v1511, 0
  %1617 = vmatprep.subr.mxu0 0.0
  %1618 = vmatpush1.msra.mxu0 %v29
  %1619 = vmatprep.subr.mxu0 0.0
  %1620 = vmatpush1.msra.mxu0 %v30
  %1621 = vmatprep.subr.mxu0 0.0
  %1622 = vmatpush1.msra.mxu0 %v31
  %1623 = vmatprep.subr.mxu0 0.0
  %1624 = vmatpush1.msra.mxu0 %v32
  %1625 = vmatprep.subr.mxu0 0.0
  %1626 = vmatpush1.msra.mxu0 0.0
  %1627 = vmatprep.subr.mxu0 0.0
  %1628 = vmatpush1.msra.mxu0 0.0
  %1629 = vmatprep.subr.mxu0 0.0
  %1630 = vmatpush1.msra.mxu0 0.0
  %1631 = vmatprep.subr.mxu0 0.0
  %1632 = vmatpush1.msra.mxu0 0.0
  %1633 = vmatprep.subr.mxu0 0.0
  %1634 = vmatpush1.msra.mxu0 0.0
  %1635 = vmatprep.subr.mxu0 0.0
  %1636 = vmatpush1.msra.mxu0 0.0
  %1637 = vmatprep.subr.mxu0 0.0
  %1638 = vmatpush1.msra.mxu0 0.0
  %1639 = vmatprep.subr.mxu0 0.0
  %1640 = vmatpush1.msra.mxu0 0.0
  %1641 = vmatprep.subr.mxu0 0.0
  %1642 = vmatpush1.msra.mxu0 0.0
  %1643 = vmatprep.subr.mxu0 0.0
  %1644 = vmatpush1.msra.mxu0 0.0
  %1645 = vmatprep.subr.mxu0 0.0
  %1646 = vmatpush1.msra.mxu0 0.0
  %1647 = vmatprep.subr.mxu0 0.0
  %1648 = vmatpush1.msra.mxu0 0.0
  %1649 = vmatprep.subr.mxu0 0.0
  %1650 = vmatpush1.msra.mxu0 0.0
  %1651 = vmatprep.subr.mxu0 0.0
  %1652 = vmatpush1.msra.mxu0 0.0
  %1653 = vmatprep.subr.mxu0 0.0
  %1654 = vmatpush1.msra.mxu0 0.0
  %1655 = vmatprep.subr.mxu0 0.0
  %1656 = vmatpush1.msra.mxu0 0.0
  %1657 = vmatprep.subr.mxu0 0.0
  %1658 = vmatpush1.msra.mxu0 0.0
  %1659 = vmatprep.subr.mxu0 0.0
  %1660 = vmatpush1.msra.mxu0 0.0
  %1661 = vmatprep.subr.mxu0 0.0
  %1662 = vmatpush1.msra.mxu0 0.0
  %1663 = vmatprep.subr.mxu0 0.0
  %1664 = vmatpush1.msra.mxu0 0.0
  %1665 = vmatprep.subr.mxu0 0.0
  %1666 = vmatpush1.msra.mxu0 0.0
  %1667 = vmatprep.subr.mxu0 0.0
  %1668 = vmatpush1.msra.mxu0 0.0
  %1669 = vmatprep.subr.mxu0 0.0
  %1670 = vmatpush1.msra.mxu0 0.0
  %1671 = vmatprep.subr.mxu0 0.0
  %1672 = vmatpush1.msra.mxu0 0.0
  %1673 = vmatprep.subr.mxu0 0.0
  %1674 = vmatpush1.msra.mxu0 0.0
  %1675 = vmatprep.subr.mxu0 0.0
  %1676 = vmatpush1.msra.mxu0 0.0
  %1677 = vmatprep.subr.mxu0 0.0
  %1678 = vmatpush1.msra.mxu0 0.0
  %1679 = vmatprep.subr.mxu0 0.0
  %1680 = vmatpush1.msra.mxu0 0.0
  %1681 = vmatprep.mubr.f32.mxu0 0.0
  %1682 = vmatmul.mubr.f32.gmra.mrb[0].mxu0 %v1615
  %v1683 = vpop.f32.mrb[0].mxu0
  %v1684 = vadd.f32 0.0, %v1683
  %v1685 = vpop.f32.mrb[0].mxu0
  %1686 = vdwg.mxu0
  %v1687 = vadd.f32 %v192, %v1684
  %v1688 = vxor.u32 %v1687, 2147483648
  %v1689 = vmul.f32 %v1688, 1.442695
  %v1690 = vpow.pop %v1689
  %v1691 = vadd.f32 %v1690, 1.0
  %v1692 = vrcp.pop %v1691
  %v1693 = vmul.f32 1.0, %v1692
  %v1694 = vtanh.pop %v1687
  %v1695 = vmul.f32 %v1693, %v1502
  %1697 = vrot.lane.b32.xlu0 %v1694, 32
  %v1698 = vpop.permute.xlu0 %1697
  %v1700 = vmul.f32 %v1693, %v1698
  %1702 = vrot.lane.b32.xlu0 %v1700, 32
  %v1703 = vpop.permute.xlu0 %1702
  %v1705 = vadd.f32 %v1695, %v1703
  %v1706 = vtanh.pop %v1705
  %1708 = vrot.lane.b32.xlu0 %v1706, 32
  %v1709 = vpop.permute.xlu0 %1708
  %v1711 = vmul.f32 %v1693, %v1709
  %1713 = vrot.lane.b32.xlu0 %v1711, 64
  %v1714 = vpop.permute.xlu0 %1713
  %1717 = vrot.lane.b32.xlu0 %v1614, 96
  %v1718 = vpop.permute.xlu0 %1717
  %v1720 = vsel %vm195, %v1714, %v1718
  %v1722 = vsel %vm299, %v1720, 0
  %1724 = vmatprep.subr.mxu0 0.0
  %1725 = vmatpush1.msra.mxu0 %v33
  %1726 = vmatprep.subr.mxu0 0.0
  %1727 = vmatpush1.msra.mxu0 %v34
  %1728 = vmatprep.subr.mxu0 0.0
  %1729 = vmatpush1.msra.mxu0 %v35
  %1730 = vmatprep.subr.mxu0 0.0
  %1731 = vmatpush1.msra.mxu0 %v36
  %1732 = vmatprep.subr.mxu0 0.0
  %1733 = vmatpush1.msra.mxu0 %v37
  %1734 = vmatprep.subr.mxu0 0.0
  %1735 = vmatpush1.msra.mxu0 %v38
  %1736 = vmatprep.subr.mxu0 0.0
  %1737 = vmatpush1.msra.mxu0 %v39
  %1738 = vmatprep.subr.mxu0 0.0
  %1739 = vmatpush1.msra.mxu0 %v40
  %1740 = vmatprep.subr.mxu0 0.0
  %1741 = vmatpush1.msra.mxu0 0.0
  %1742 = vmatprep.subr.mxu0 0.0
  %1743 = vmatpush1.msra.mxu0 0.0
  %1744 = vmatprep.subr.mxu0 0.0
  %1745 = vmatpush1.msra.mxu0 0.0
  %1746 = vmatprep.subr.mxu0 0.0
  %1747 = vmatpush1.msra.mxu0 0.0
  %1748 = vmatprep.subr.mxu0 0.0
  %1749 = vmatpush1.msra.mxu0 0.0
  %1750 = vmatprep.subr.mxu0 0.0
  %1751 = vmatpush1.msra.mxu0 0.0
  %1752 = vmatprep.subr.mxu0 0.0
  %1753 = vmatpush1.msra.mxu0 0.0
  %1754 = vmatprep.subr.mxu0 0.0
  %1755 = vmatpush1.msra.mxu0 0.0
  %1756 = vmatprep.subr.mxu0 0.0
  %1757 = vmatpush1.msra.mxu0 0.0
  %1758 = vmatprep.subr.mxu0 0.0
  %1759 = vmatpush1.msra.mxu0 0.0
  %1760 = vmatprep.subr.mxu0 0.0
  %1761 = vmatpush1.msra.mxu0 0.0
  %1762 = vmatprep.subr.mxu0 0.0
  %1763 = vmatpush1.msra.mxu0 0.0
  %1764 = vmatprep.subr.mxu0 0.0
  %1765 = vmatpush1.msra.mxu0 0.0
  %1766 = vmatprep.subr.mxu0 0.0
  %1767 = vmatpush1.msra.mxu0 0.0
  %1768 = vmatprep.subr.mxu0 0.0
  %1769 = vmatpush1.msra.mxu0 0.0
  %1770 = vmatprep.subr.mxu0 0.0
  %1771 = vmatpush1.msra.mxu0 0.0
  %1772 = vmatprep.subr.mxu0 0.0
  %1773 = vmatpush1.msra.mxu0 0.0
  %1774 = vmatprep.subr.mxu0 0.0
  %1775 = vmatpush1.msra.mxu0 0.0
  %1776 = vmatprep.subr.mxu0 0.0
  %1777 = vmatpush1.msra.mxu0 0.0
  %1778 = vmatprep.subr.mxu0 0.0
  %1779 = vmatpush1.msra.mxu0 0.0
  %1780 = vmatprep.subr.mxu0 0.0
  %1781 = vmatpush1.msra.mxu0 0.0
  %1782 = vmatprep.subr.mxu0 0.0
  %1783 = vmatpush1.msra.mxu0 0.0
  %1784 = vmatprep.subr.mxu0 0.0
  %1785 = vmatpush1.msra.mxu0 0.0
  %1786 = vmatprep.subr.mxu0 0.0
  %1787 = vmatpush1.msra.mxu0 0.0
  %1788 = vmatprep.mubr.f32.mxu0 0.0
  %1789 = vmatmul.mubr.f32.gmra.mrb[0].mxu0 %v1722
  %v1790 = vpop.f32.mrb[0].mxu0
  %v1791 = vadd.f32 %v46, %v1790
  %v1792 = vpop.f32.mrb[0].mxu0
  %1793 = vdwg.mxu0
  %v1794 = vxor.u32 %v1791, 2147483648
  %v1795 = vmul.f32 %v1794, 1.442695
  %v1796 = vpow.pop %v1795
  %v1797 = vadd.f32 %v1796, 1.0
  %v1798 = vrcp.pop %v1797
  %v1799 = vmul.f32 1.0, %v1798
  %v1800 = vtanh.pop %v1791
  %v1801 = vmul.f32 %v1799, %v1608
  %1803 = vrot.lane.b32.xlu0 %v1800, 32
  %v1804 = vpop.permute.xlu0 %1803
  %v1806 = vmul.f32 %v1799, %v1804
  %1808 = vrot.lane.b32.xlu0 %v1806, 32
  %v1809 = vpop.permute.xlu0 %1808
  %v1811 = vadd.f32 %v1801, %v1809
  %v1812 = vtanh.pop %v1811
  %1814 = vrot.lane.b32.xlu0 %v1812, 32
  %v1815 = vpop.permute.xlu0 %1814
  %v1817 = vmul.f32 %v1799, %v1815
  %v1818 = vld [vmem:[%s6] sm:$0xff]
  %v1819 = vld [vmem:[%s6 + $0x8] sm:$0xff]
  %v1820 = vld [vmem:[%s6 + $0x10] sm:$0xff]
  %v1821 = vld [vmem:[%s6 + $0x18] sm:$0xff]
  %v1822 = vld [vmem:[%s7] sm:$0x1]
  %v1824 = vlaneseq
  %v1825 = vshrl.u32 %v1824, 7
  %v1826 = vsub.s32 0, %v1825
  %v1827 = vrot.slane %v1822, %v1826
  %1830 = vrot.lane.b32.xlu0 %v1817, 64
  %v1831 = vpop.permute.xlu0 %1830
  %v1832 = vsel %vm195, %v1831, 0
  %1834 = vmatprep.subr.mxu0 0.0
  %1835 = vmatpush1.msra.mxu0 %v1818
  %1836 = vmatprep.subr.mxu0 0.0
  %1837 = vmatpush1.msra.mxu0 %v1819
  %1838 = vmatprep.subr.mxu0 0.0
  %1839 = vmatpush1.msra.mxu0 %v1820
  %1840 = vmatprep.subr.mxu0 0.0
  %1841 = vmatpush1.msra.mxu0 %v1821
  %1842 = vmatprep.subr.mxu0 0.0
  %1843 = vmatpush1.msra.mxu0 0.0
  %1844 = vmatprep.subr.mxu0 0.0
  %1845 = vmatpush1.msra.mxu0 0.0
  %1846 = vmatprep.subr.mxu0 0.0
  %1847 = vmatpush1.msra.mxu0 0.0
  %1848 = vmatprep.subr.mxu0 0.0
  %1849 = vmatpush1.msra.mxu0 0.0
  %1850 = vmatprep.subr.mxu0 0.0
  %1851 = vmatpush1.msra.mxu0 0.0
  %1852 = vmatprep.subr.mxu0 0.0
  %1853 = vmatpush1.msra.mxu0 0.0
  %1854 = vmatprep.subr.mxu0 0.0
  %1855 = vmatpush1.msra.mxu0 0.0
  %1856 = vmatprep.subr.mxu0 0.0
  %1857 = vmatpush1.msra.mxu0 0.0
  %1858 = vmatprep.subr.mxu0 0.0
  %1859 = vmatpush1.msra.mxu0 0.0
  %1860 = vmatprep.subr.mxu0 0.0
  %1861 = vmatpush1.msra.mxu0 0.0
  %1862 = vmatprep.subr.mxu0 0.0
  %1863 = vmatpush1.msra.mxu0 0.0
  %1864 = vmatprep.subr.mxu0 0.0
  %1865 = vmatpush1.msra.mxu0 0.0
  %1866 = vmatprep.subr.mxu0 0.0
  %1867 = vmatpush1.msra.mxu0 0.0
  %1868 = vmatprep.subr.mxu0 0.0
  %1869 = vmatpush1.msra.mxu0 0.0
  %1870 = vmatprep.subr.mxu0 0.0
  %1871 = vmatpush1.msra.mxu0 0.0
  %1872 = vmatprep.subr.mxu0 0.0
  %1873 = vmatpush1.msra.mxu0 0.0
  %1874 = vmatprep.subr.mxu0 0.0
  %1875 = vmatpush1.msra.mxu0 0.0
  %1876 = vmatprep.subr.mxu0 0.0
  %1877 = vmatpush1.msra.mxu0 0.0
  %1878 = vmatprep.subr.mxu0 0.0
  %1879 = vmatpush1.msra.mxu0 0.0
  %1880 = vmatprep.subr.mxu0 0.0
  %1881 = vmatpush1.msra.mxu0 0.0
  %1882 = vmatprep.subr.mxu0 0.0
  %1883 = vmatpush1.msra.mxu0 0.0
  %1884 = vmatprep.subr.mxu0 0.0
  %1885 = vmatpush1.msra.mxu0 0.0
  %1886 = vmatprep.subr.mxu0 0.0
  %1887 = vmatpush1.msra.mxu0 0.0
  %1888 = vmatprep.subr.mxu0 0.0
  %1889 = vmatpush1.msra.mxu0 0.0
  %1890 = vmatprep.subr.mxu0 0.0
  %1891 = vmatpush1.msra.mxu0 0.0
  %1892 = vmatprep.subr.mxu0 0.0
  %1893 = vmatpush1.msra.mxu0 0.0
  %1894 = vmatprep.subr.mxu0 0.0
  %1895 = vmatpush1.msra.mxu0 0.0
  %1896 = vmatprep.subr.mxu0 0.0
  %1897 = vmatpush1.msra.mxu0 0.0
  %1898 = vmatprep.mubr.f32.mxu0 0.0
  %1899 = vmatmul.mubr.f32.gmra.mrb[0].mxu0 %v1832
  %v1900 = vpop.f32.mrb[0].mxu0
  %v1901 = vadd.f32 %v1827, %v1900
  %v1902 = vpop.f32.mrb[0].mxu0
  %1903 = vdwg.mxu0
  %vm1904 = vcmask 31744
  %1905 = vst.msk [vmem:[%s8] sm:$0xff] %vm1904, %v1901
  // Predicated region
  $region34: #{_lstm_net_forward_impl.1} parent=0 // pred_check
    _
  $region35: #{_lstm_net_forward_impl.1} parent=0 // pred_check_branch
    %1907 = sbr.rel (0) target = $region37
  $region36: #{_lstm_net_forward_impl.1} parent=0 // pred_region
    _
  $region37: #{_lstm_net_forward_impl.1} parent=0 // pred_fallthru
    _
  // Predicated region
  $region38: #{_lstm_net_forward_impl.1} parent=0 // pred_check
    _
  $region39: #{_lstm_net_forward_impl.1} parent=0 // pred_check_branch
    %1909 = sbr.rel (0) target = $region41
  $region40: #{_lstm_net_forward_impl.1} parent=0 // pred_region
    _
  $region41: #{_lstm_net_forward_impl.1} parent=0 // pred_fallthru
    _

</llo_original>
